<compile_context>
chip_gen: v5e
topology: v5e:2x2
jax: 0.10.0
libtpu: 0.0.40
codegen_flags: <defaults>
</compile_context>

<pallas_src>
import jax
import jax.numpy as jnp
from jax.experimental import pallas as pl
from jax.experimental.pallas import tpu as pltpu

INPUT_SIZE = 784
HIDDEN_SIZE = 500
NUM_CLASSES = 10

HIDDEN_PAD = 512   # 500 -> 512 (multiple of 128, dense lanes)
OUT_PAD = 128      # 10  -> 128 (lane-dense output stores)


def _round_up(x, m):
    return (x + m - 1) // m * m


def mlp_kernel(x_ref, w1_ref, b1_ref, w2_ref, b2_ref, o_ref):
    # Weights arrive as bf16 (half the HBM bytes); cast in VMEM, accumulate f32.
    w1 = w1_ref[...].astype(jnp.float32)
    h = jnp.dot(x_ref[...], w1, preferred_element_type=jnp.float32)
    h = jnp.maximum(h + b1_ref[...], 0.0)                     # bias + ReLU in f32
    w2 = w2_ref[...].astype(jnp.float32)
    out = jnp.dot(h, w2, preferred_element_type=jnp.float32)
    o_ref[...] = (out + b2_ref[...]).astype(o_ref.dtype)


def prepare_params(w1, b1, w2, b2):
    """Pad hidden 500->512 / classes 10->128 with zeros; weights -> bf16, biases f32."""
    w1p = jnp.zeros((INPUT_SIZE, HIDDEN_PAD), jnp.bfloat16)
    w1p = w1p.at[:, :HIDDEN_SIZE].set(w1.astype(jnp.bfloat16))
    b1p = jnp.zeros((1, HIDDEN_PAD), jnp.float32)
    b1p = b1p.at[:, :HIDDEN_SIZE].set(b1.reshape(1, -1).astype(jnp.float32))
    w2p = jnp.zeros((HIDDEN_PAD, OUT_PAD), jnp.bfloat16)
    w2p = w2p.at[:HIDDEN_SIZE, :NUM_CLASSES].set(w2.astype(jnp.bfloat16))
    b2p = jnp.zeros((1, OUT_PAD), jnp.float32)
    b2p = b2p.at[:, :NUM_CLASSES].set(b2.reshape(1, -1).astype(jnp.float32))
    return w1p, b1p, w2p, b2p


def net_forward(x, w1p, b1p, w2p, b2p, *, tb=256):
    """x: [B, INPUT_SIZE] f32, padded bf16/f32 params -> [B, NUM_CLASSES] f32."""
    B = x.shape[0]
    tb = min(tb, _round_up(B, 8))          # batch tile (multiple of 8 sublanes)
    b_pad = _round_up(B, tb)
    if b_pad != B:
        x = jnp.pad(x, ((0, b_pad - B), (0, 0)))

    # Actual VMEM footprint (+ headroom) instead of the full 64 MiB of v7x.
    weight_bytes = (INPUT_SIZE * HIDDEN_PAD + HIDDEN_PAD * OUT_PAD) * 2 \
                   + (HIDDEN_PAD + OUT_PAD) * 4
    stream_bytes = 2 * tb * (INPUT_SIZE + OUT_PAD) * 4   # double-buffered x / out
    scratch_bytes = tb * HIDDEN_PAD * 4                  # f32 hidden activations
    vmem_limit = int(min(48 << 20,
                         2 * weight_bytes + stream_bytes + scratch_bytes + (4 << 20)))

    out_padded = pl.pallas_call(
        mlp_kernel,
        out_shape=jax.ShapeDtypeStruct((b_pad, OUT_PAD), jnp.float32),
        grid=(b_pad // tb,),
        in_specs=[
            pl.BlockSpec((tb, INPUT_SIZE), lambda i: (i, 0)),        # x tile (streamed)
            pl.BlockSpec((INPUT_SIZE, HIDDEN_PAD), lambda i: (0, 0)),  # w1 resident
            pl.BlockSpec((1, HIDDEN_PAD), lambda i: (0, 0)),           # b1 resident
            pl.BlockSpec((HIDDEN_PAD, OUT_PAD), lambda i: (0, 0)),     # w2 resident
            pl.BlockSpec((1, OUT_PAD), lambda i: (0, 0)),              # b2 resident
        ],
        out_specs=pl.BlockSpec((tb, OUT_PAD), lambda i: (i, 0)),
        compiler_params=pltpu.CompilerParams(
            dimension_semantics=("parallel",),   # lets v7x use both TensorCores
            vmem_limit_bytes=vmem_limit,
        ),
    )(x, w1p, b1p, w2p, b2p)

    return out_padded[:B, :NUM_CLASSES]


def init_params(key):
    """Deterministic init mimicking nn.Linear's uniform(-1/sqrt(fan_in), 1/sqrt(fan_in))."""
    k1, k2, k3, k4 = jax.random.split(key, 4)
    bound1 = 1.0 / (INPUT_SIZE ** 0.5)
    bound2 = 1.0 / (HIDDEN_SIZE ** 0.5)
    # Stored as [in, out] (transposed relative to PyTorch's [out, in]).
    w1 = jax.random.uniform(k1, (INPUT_SIZE, HIDDEN_SIZE), jnp.float32, -bound1, bound1)
    b1 = jax.random.uniform(k2, (HIDDEN_SIZE,), jnp.float32, -bound1, bound1)
    w2 = jax.random.uniform(k3, (HIDDEN_SIZE, NUM_CLASSES), jnp.float32, -bound2, bound2)
    b2 = jax.random.uniform(k4, (NUM_CLASSES,), jnp.float32, -bound2, bound2)
    return w1, b1, w2, b2


if __name__ == "__main__":
    key = jax.random.PRNGKey(0)
    k_x, k_p = jax.random.split(key)

    B = 64  # small batch; tb=32 below exercises a 2-step batch grid
    x = jax.random.normal(k_x, (B, INPUT_SIZE), jnp.float32)
    w1, b1, w2, b2 = init_params(k_p)
    w1p, b1p, w2p, b2p = prepare_params(w1, b1, w2, b2)

    out = net_forward(x, w1p, b1p, w2p, b2p, tb=32)
    out = jax.block_until_ready(out)

    # Reference in plain JAX using the same bf16-rounded weights (f32 math).
    w1f = w1p[:, :HIDDEN_SIZE].astype(jnp.float32)
    w2f = w2p[:HIDDEN_SIZE, :NUM_CLASSES].astype(jnp.float32)
    h_ref = jnp.maximum(
        jnp.dot(x, w1f, precision=jax.lax.Precision.HIGHEST) + b1[None, :], 0.0)
    ref = jnp.dot(h_ref, w2f, precision=jax.lax.Precision.HIGHEST) + b2[None, :]

    assert out.shape == (B, NUM_CLASSES)
    assert jnp.allclose(out, ref, atol=2e-3, rtol=2e-3)

    print("KERNEL_OK")
</pallas_src>

<mosaic_0001>
module attributes {stable_mosaic.version = 11 : i64} {
  func.func @mlp_kernel(%arg0: i32, %arg1: memref<32x784xf32, #tpu.memory_space<vmem>>, %arg2: memref<784x512xbf16, #tpu.memory_space<vmem>>, %arg3: memref<1x512xf32, #tpu.memory_space<vmem>>, %arg4: memref<512x128xbf16, #tpu.memory_space<vmem>>, %arg5: memref<1x128xf32, #tpu.memory_space<vmem>>, %arg6: memref<32x128xf32, #tpu.memory_space<vmem>>) attributes {dimension_semantics = [#tpu.dimension_semantics<parallel>], iteration_bounds = array<i64: 2>, scalar_prefetch = 0 : i64, scratch_operands = 0 : i64, tpu.core_type = #tpu.core_type<tc>, window_params = [{transform_indices = @transform_0, window_bounds = array<i64: 32, 784>}, {pipeline_mode = #tpu.pipeline_mode<synchronous>, transform_indices = @transform_1, window_bounds = array<i64: 784, 512>}, {pipeline_mode = #tpu.pipeline_mode<synchronous>, transform_indices = @transform_2, window_bounds = array<i64: 1, 512>}, {pipeline_mode = #tpu.pipeline_mode<synchronous>, transform_indices = @transform_3, window_bounds = array<i64: 512, 128>}, {pipeline_mode = #tpu.pipeline_mode<synchronous>, transform_indices = @transform_4, window_bounds = array<i64: 1, 128>}, {transform_indices = @transform_5, window_bounds = array<i64: 32, 128>}]} {
    %c0 = arith.constant 0 : index
    %c0_0 = arith.constant 0 : index
    %0 = vector.load %arg2[%c0, %c0_0] : memref<784x512xbf16, #tpu.memory_space<vmem>>, vector<784x512xbf16>
    %1 = arith.extf %0 : vector<784x512xbf16> to vector<784x512xf32>
    %c0_1 = arith.constant 0 : index
    %c0_2 = arith.constant 0 : index
    %2 = vector.load %arg1[%c0_1, %c0_2] : memref<32x784xf32, #tpu.memory_space<vmem>>, vector<32x784xf32>
    %cst = arith.constant dense<0.000000e+00> : vector<32x512xf32>
    %3 = tpu.matmul %2, %1, %cst {dimension_numbers = #tpu.dot_dimension_numbers<[1], [0], [0], [1], [0, 0, 1, 1], [], []>} : vector<32x784xf32>, vector<784x512xf32>, vector<32x512xf32> -> vector<32x512xf32>
    %c0_3 = arith.constant 0 : index
    %c0_4 = arith.constant 0 : index
    %4 = vector.load %arg3[%c0_3, %c0_4] : memref<1x512xf32, #tpu.memory_space<vmem>>, vector<1x512xf32>
    %5 = vector.broadcast %4 : vector<1x512xf32> to vector<32x512xf32>
    %6 = arith.addf %3, %5 : vector<32x512xf32>
    %cst_5 = arith.constant 0.000000e+00 : f32
    %7 = vector.broadcast %cst_5 : f32 to vector<32x512xf32>
    %8 = arith.maximumf %6, %7 : vector<32x512xf32>
    %c0_6 = arith.constant 0 : index
    %c0_7 = arith.constant 0 : index
    %9 = vector.load %arg4[%c0_6, %c0_7] : memref<512x128xbf16, #tpu.memory_space<vmem>>, vector<512x128xbf16>
    %10 = arith.extf %9 : vector<512x128xbf16> to vector<512x128xf32>
    %cst_8 = arith.constant dense<0.000000e+00> : vector<32x128xf32>
    %11 = tpu.matmul %8, %10, %cst_8 {dimension_numbers = #tpu.dot_dimension_numbers<[1], [0], [0], [1], [0, 0, 1, 1], [], []>} : vector<32x512xf32>, vector<512x128xf32>, vector<32x128xf32> -> vector<32x128xf32>
    %c0_9 = arith.constant 0 : index
    %c0_10 = arith.constant 0 : index
    %12 = vector.load %arg5[%c0_9, %c0_10] : memref<1x128xf32, #tpu.memory_space<vmem>>, vector<1x128xf32>
    %13 = vector.broadcast %12 : vector<1x128xf32> to vector<32x128xf32>
    %14 = arith.addf %11, %13 : vector<32x128xf32>
    %c0_11 = arith.constant 0 : index
    %c0_12 = arith.constant 0 : index
    %15 = vector.load %arg6[%c0_11, %c0_12] : memref<32x128xf32, #tpu.memory_space<vmem>>, vector<32x128xf32>
    tpu.vector_store %arg6[%c0_11, %c0_12], %14 {strides = array<i32>} : memref<32x128xf32, #tpu.memory_space<vmem>>, vector<32x128xf32>,
    return
  }
  func.func @transform_0(%arg0: i32) -> (i32, i32) {
    %c0_i32 = arith.constant 0 : i32
    %c0_i32_0 = arith.constant 0 : i32
    return %arg0, %c0_i32 : i32, i32
  }
  func.func @transform_1(%arg0: i32) -> (i32, i32) {
    %c0_i32 = arith.constant 0 : i32
    %c0_i32_0 = arith.constant 0 : i32
    %c0_i32_1 = arith.constant 0 : i32
    return %c0_i32, %c0_i32_0 : i32, i32
  }
  func.func @transform_2(%arg0: i32) -> (i32, i32) {
    %c0_i32 = arith.constant 0 : i32
    %c0_i32_0 = arith.constant 0 : i32
    %c0_i32_1 = arith.constant 0 : i32
    return %c0_i32, %c0_i32_0 : i32, i32
  }
  func.func @transform_3(%arg0: i32) -> (i32, i32) {
    %c0_i32 = arith.constant 0 : i32
    %c0_i32_0 = arith.constant 0 : i32
    %c0_i32_1 = arith.constant 0 : i32
    return %c0_i32, %c0_i32_0 : i32, i32
  }
  func.func @transform_4(%arg0: i32) -> (i32, i32) {
    %c0_i32 = arith.constant 0 : i32
    %c0_i32_0 = arith.constant 0 : i32
    %c0_i32_1 = arith.constant 0 : i32
    return %c0_i32, %c0_i32_0 : i32, i32
  }
  func.func @transform_5(%arg0: i32) -> (i32, i32) {
    %c0_i32 = arith.constant 0 : i32
    %c0_i32_0 = arith.constant 0 : i32
    return %arg0, %c0_i32 : i32, i32
  }
}

</mosaic_0001>

<llo_original>
// kernel: tpu_custom_call.1
$region0: #{tpu_custom_call.1}
  #allocation0 [shape = 'u32[]', space=smem, size = 0x4, offset = 0x4, fixed_abs, tag = 'smem constant byte address 0x4 - core index']
  #allocation1 [shape = 'u32[72,128]{1,0:T(1,128)}', space=vmem, size = 0x9000, scoped, tag = 'internal scratch']
  %s0 = inlined_call_operand.hbm [shape: f32[64,784], index: 0, kind: input, shape index: {}]
  %s1 = inlined_call_operand.hbm [shape: bf16[784,512], index: 1, kind: input, shape index: {}]
  %s2 = inlined_call_operand.hbm [shape: f32[1,512], index: 2, kind: input, shape index: {}]
  %s3 = inlined_call_operand.hbm [shape: bf16[512,128], index: 3, kind: input, shape index: {}]
  %s4 = inlined_call_operand.vmem [shape: f32[1,128], index: 4, kind: input, shape index: {}]
  %s5 = inlined_call_operand.hbm [shape: f32[64,128], index: 5, kind: output, shape index: {}]
  %s6 = sld [smem:[#allocation0]]
  $region69: #{tpu_custom_call.1} parent=0
    _
  %s8 = ssub.s32 1, %s6
  %s9 = scalar_select 0, %s8, %s6
  $region1: #{tpu_custom_call.1} parent=0
    #allocation2 [shape = 'u8[229376]{0}', space=vmem, size = 0x38000, scoped, tag = 'input window, operand 0']
    #allocation3 [shape = 's32[2]{0}', space=sflag, size = 0x8, scoped, tag = 'scoped memory for tpu_custom_call.1']
    #allocation4 [shape = 's32[2]{0}', space=sflag, size = 0x8, scoped, tag = 'scoped memory for tpu_custom_call.1']
    #allocation5 [shape = 'u8[802816]{0}', space=vmem, size = 0xc4000, scoped, tag = 'input window, operand 1, single buffered']
    #allocation6 [shape = 's32[1]{0}', space=sflag, size = 0x4, scoped, tag = 'scoped memory for tpu_custom_call.1']
    #allocation7 [shape = 'u8[2048]{0}', space=vmem, size = 0x800, scoped, tag = 'input window, operand 2, single buffered']
    #allocation8 [shape = 'u8[131072]{0}', space=vmem, size = 0x20000, scoped, tag = 'input window, operand 3, single buffered']
    #allocation9 [shape = 's32[1]{0}', space=sflag, size = 0x4, scoped, tag = 'scoped memory for tpu_custom_call.1']
    #allocation10 [shape = 'u8[32768]{0}', space=vmem, size = 0x8000, scoped, tag = 'output window, operand 0']
    %10 = vsyncpa [#allocation3], 0
    %s11 = scalar_lea.sflag [#allocation3], 1
    %12 = vsyncpa %s11, 0
    %13 = vsyncpa [#allocation6], 0
    %14 = vsyncpa [#allocation9], 0
    %15 = vsyncpa [#allocation4], 0
    %s16 = scalar_lea.sflag [#allocation4], 1
    %17 = vsyncpa %s16, 0
    loop: start=0, step=1, limit=4
    $region2: #{tpu_custom_call.1} parent=1 // loop_pre_header
      _
    $region3: #{tpu_custom_call.1} parent=1 // loop_header
      %s19 = sphi 0, %s23
      %p20 = scmp.ge.s32.totalorder %s19, 4
      %s29 = sphi 0, %s31
      %s32 = sphi 0, %s29
      %s33 = sphi 0, %s32
      %s49 = sphi 0, %s33
      %s53 = sphi 0, %s53
      %s55 = sphi 0, %s53
      %s56 = sphi 0, %s55
      %s70 = sphi 0, %s56
      %s74 = sphi 0, %s74
      %s76 = sphi 0, %s74
      %s77 = sphi 0, %s76
      %s91 = sphi 0, %s77
      %s95 = sphi 0, %s95
      %s97 = sphi 0, %s95
      %s98 = sphi 0, %s97
      %s112 = sphi 0, %s98
      %s116 = sphi 0, %s116
      %s118 = sphi 0, %s116
      %s119 = sphi 0, %s118
      %s133 = sphi 0, %s119
      %s139 = sphi 0, %s141
      %s142 = sphi 0, %s139
      %s143 = sphi 0, %s142
      %s159 = sphi 0, %s143
    $region4: #{tpu_custom_call.1} parent=1 // loop_header_branch
      %22 = sbr.rel (%p20) target = $region8
    $region5: #{tpu_custom_call.1} parent=1 // loop_body
      %s24 = ssub.s32 %s19, 1
      %s25 = ssub.s32 %s19, 2
      %s26 = sadd.s32 %s19, 1
      %s27 = ssub.s32 %s19, %s26
      %p28 = scmp.eq.s32.totalorder %s27, 0
      %s30 = sadd.s32 %s29, 1
      %s31 = scalar_select %p28, %s29, %s30
      %p34 = pneg %p28
      %p35 = scmp.eq.s32.totalorder %s19, 1
      %p36 = por %p34, %p35
      %p37 = scmp.ne.s32.totalorder %s29, %s32
      %p38 = scmp.eq.s32.totalorder %s19, 0
      %p39 = por %p37, %p38
      %p40 = scmp.ne.s32.totalorder %s29, %s32
      %p41 = scmp.eq.s32.totalorder %s24, 1
      %p42 = por %p40, %p41
      %p43 = scmp.ne.s32.totalorder %s32, %s33
      %p44 = scmp.eq.s32.totalorder %s24, 0
      %p45 = por %p43, %p44
      %p46 = scmp.ne.s32.totalorder %s32, %s33
      %p47 = scmp.eq.s32.totalorder %s25, 1
      %p48 = por %p46, %p47
      %p50 = scmp.ne.s32.totalorder %s33, %s49
      %p51 = scmp.eq.s32.totalorder %s25, 0
      %p52 = por %p50, %p51
      %s54 = sadd.s32 %s53, 1
      %p57 = scmp.eq.s32.totalorder %s19, 1
      %p58 = scmp.ne.s32.totalorder %s53, %s55
      %p59 = scmp.eq.s32.totalorder %s19, 0
      %p60 = por %p58, %p59
      %p61 = scmp.ne.s32.totalorder %s53, %s55
      %p62 = scmp.eq.s32.totalorder %s24, 1
      %p63 = por %p61, %p62
      %p64 = scmp.ne.s32.totalorder %s55, %s56
      %p65 = scmp.eq.s32.totalorder %s24, 0
      %p66 = por %p64, %p65
      %p67 = scmp.ne.s32.totalorder %s55, %s56
      %p68 = scmp.eq.s32.totalorder %s25, 1
      %p69 = por %p67, %p68
      %p71 = scmp.ne.s32.totalorder %s56, %s70
      %p72 = scmp.eq.s32.totalorder %s25, 0
      %p73 = por %p71, %p72
      %s75 = sadd.s32 %s74, 1
      %p78 = scmp.eq.s32.totalorder %s19, 1
      %p79 = scmp.ne.s32.totalorder %s74, %s76
      %p80 = scmp.eq.s32.totalorder %s19, 0
      %p81 = por %p79, %p80
      %p82 = scmp.ne.s32.totalorder %s74, %s76
      %p83 = scmp.eq.s32.totalorder %s24, 1
      %p84 = por %p82, %p83
      %p85 = scmp.ne.s32.totalorder %s76, %s77
      %p86 = scmp.eq.s32.totalorder %s24, 0
      %p87 = por %p85, %p86
      %p88 = scmp.ne.s32.totalorder %s76, %s77
      %p89 = scmp.eq.s32.totalorder %s25, 1
      %p90 = por %p88, %p89
      %p92 = scmp.ne.s32.totalorder %s77, %s91
      %p93 = scmp.eq.s32.totalorder %s25, 0
      %p94 = por %p92, %p93
      %s96 = sadd.s32 %s95, 1
      %p99 = scmp.eq.s32.totalorder %s19, 1
      %p100 = scmp.ne.s32.totalorder %s95, %s97
      %p101 = scmp.eq.s32.totalorder %s19, 0
      %p102 = por %p100, %p101
      %p103 = scmp.ne.s32.totalorder %s95, %s97
      %p104 = scmp.eq.s32.totalorder %s24, 1
      %p105 = por %p103, %p104
      %p106 = scmp.ne.s32.totalorder %s97, %s98
      %p107 = scmp.eq.s32.totalorder %s24, 0
      %p108 = por %p106, %p107
      %p109 = scmp.ne.s32.totalorder %s97, %s98
      %p110 = scmp.eq.s32.totalorder %s25, 1
      %p111 = por %p109, %p110
      %p113 = scmp.ne.s32.totalorder %s98, %s112
      %p114 = scmp.eq.s32.totalorder %s25, 0
      %p115 = por %p113, %p114
      %s117 = sadd.s32 %s116, 1
      %p120 = scmp.eq.s32.totalorder %s19, 1
      %p121 = scmp.ne.s32.totalorder %s116, %s118
      %p122 = scmp.eq.s32.totalorder %s19, 0
      %p123 = por %p121, %p122
      %p124 = scmp.ne.s32.totalorder %s116, %s118
      %p125 = scmp.eq.s32.totalorder %s24, 1
      %p126 = por %p124, %p125
      %p127 = scmp.ne.s32.totalorder %s118, %s119
      %p128 = scmp.eq.s32.totalorder %s24, 0
      %p129 = por %p127, %p128
      %p130 = scmp.ne.s32.totalorder %s118, %s119
      %p131 = scmp.eq.s32.totalorder %s25, 1
      %p132 = por %p130, %p131
      %p134 = scmp.ne.s32.totalorder %s119, %s133
      %p135 = scmp.eq.s32.totalorder %s25, 0
      %p136 = por %p134, %p135
      %s137 = ssub.s32 %s19, %s26
      %p138 = scmp.eq.s32.totalorder %s137, 0
      %s140 = sadd.s32 %s139, 1
      %s141 = scalar_select %p138, %s139, %s140
      %p144 = pneg %p138
      %p145 = scmp.eq.s32.totalorder %s19, 1
      %p146 = por %p144, %p145
      %p147 = scmp.ne.s32.totalorder %s139, %s142
      %p148 = scmp.eq.s32.totalorder %s19, 0
      %p149 = por %p147, %p148
      %p150 = scmp.ne.s32.totalorder %s139, %s142
      %p151 = scmp.eq.s32.totalorder %s24, 1
      %p152 = por %p150, %p151
      %p153 = scmp.ne.s32.totalorder %s142, %s143
      %p154 = scmp.eq.s32.totalorder %s24, 0
      %p155 = por %p153, %p154
      %p156 = scmp.ne.s32.totalorder %s142, %s143
      %p157 = scmp.eq.s32.totalorder %s25, 1
      %p158 = por %p156, %p157
      %p160 = scmp.ne.s32.totalorder %s143, %s159
      %p161 = scmp.eq.s32.totalorder %s25, 0
      %p162 = por %p160, %p161
      %p163 = scmp.le.s32.totalorder 1, %s19
      %p164 = scmp.lt.s32.totalorder %s19, 3
      %p165 = pnand %p163, %p164
      %p166 = pneg %p165
      // Predicated region
      $region9: #{tpu_custom_call.1} parent=5 // pred_check
        _
      $region10: #{tpu_custom_call.1} parent=5 // pred_check_branch
        %168 = sbr.rel (%p165) target = $region12
      $region11: #{tpu_custom_call.1} parent=5 // pred_region
        %s169 = ssub.s32 %s19, 1
        // Predicated region
        $region13: #{tpu_custom_call.1} parent=11 // pred_check
          %p170 = pneg %p66
        $region14: #{tpu_custom_call.1} parent=11 // pred_check_branch
          %172 = sbr.rel (%p170) target = $region16
        $region15: #{tpu_custom_call.1} parent=11 // pred_region
          %174 = vsyncadd [#allocation6], 0
          %s175 = sshll.u32 %s1, 4
          %s176 = int_to_ptr.hbm [resolvable:$true] %s175
          %s177 = sshll.u32 [#allocation5], 4
          %s178 = int_to_ptr.vmem [resolvable:$true] %s177
          %183 = dma.hbm_to_vmem [thread:$0]  %s176, 25088, %s178, [#allocation6], 256, 256, 16
        $region16: #{tpu_custom_call.1} parent=11 // pred_fallthru
          _
        // Predicated region
        $region17: #{tpu_custom_call.1} parent=11 // pred_check
          %p184 = pneg %p87
        $region18: #{tpu_custom_call.1} parent=11 // pred_check_branch
          %186 = sbr.rel (%p184) target = $region20
        $region19: #{tpu_custom_call.1} parent=11 // pred_region
          %188 = vsyncadd [#allocation6], 0
          %s190 = sshll.u32 %s2, 4
          %s191 = int_to_ptr.hbm [resolvable:$true] %s190
          %s192 = sshll.u32 [#allocation7], 4
          %s193 = int_to_ptr.vmem [resolvable:$true] %s192
          %195 = dma.hbm_to_vmem [thread:$0]  %s191, 64, %s193, [#allocation6]
        $region20: #{tpu_custom_call.1} parent=11 // pred_fallthru
          _
        // Predicated region
        $region21: #{tpu_custom_call.1} parent=11 // pred_check
          %p196 = pneg %p108
        $region22: #{tpu_custom_call.1} parent=11 // pred_check_branch
          %198 = sbr.rel (%p196) target = $region24
        $region23: #{tpu_custom_call.1} parent=11 // pred_region
          %200 = vsyncadd [#allocation9], 0
          %s201 = sshll.u32 %s3, 4
          %s202 = int_to_ptr.hbm [resolvable:$true] %s201
          %s203 = sshll.u32 [#allocation8], 4
          %s204 = int_to_ptr.vmem [resolvable:$true] %s203
          %209 = dma.hbm_to_vmem [thread:$0]  %s202, 4096, %s204, [#allocation9], 64, 64, 4
        $region24: #{tpu_custom_call.1} parent=11 // pred_fallthru
          _
        // Predicated region
        $region25: #{tpu_custom_call.1} parent=11 // pred_check
          %p210 = pneg %p129
        $region26: #{tpu_custom_call.1} parent=11 // pred_check_branch
          %212 = sbr.rel (%p210) target = $region28
        $region27: #{tpu_custom_call.1} parent=11 // pred_region
          _
        $region28: #{tpu_custom_call.1} parent=11 // pred_fallthru
          _
      $region12: #{tpu_custom_call.1} parent=5 // pred_fallthru
        _
      %p213 = scmp.lt.s32.totalorder %s19, 2
      // Predicated region
      $region29: #{tpu_custom_call.1} parent=5 // pred_check
        %p214 = pneg %p213
      $region30: #{tpu_custom_call.1} parent=5 // pred_check_branch
        %216 = sbr.rel (%p214) target = $region32
      $region31: #{tpu_custom_call.1} parent=5 // pred_region
        // Predicated region
        $region33: #{tpu_custom_call.1} parent=31 // pred_check
          %p217 = pneg %p39
        $region34: #{tpu_custom_call.1} parent=31 // pred_check_branch
          %219 = sbr.rel (%p217) target = $region36
        $region35: #{tpu_custom_call.1} parent=31 // pred_region
          %s220 = sand.u32 %s29, 1
          %s221 = scalar_lea.sflag [#allocation3], %s220
          %s222 = sand.u32 %s29, 1
          %s223 = smul.addr %s222, 224
          %s224 = scalar_lea.vmem [#allocation2], %s223
          %s225 = smul.u32 4, %s19
          %227 = vsyncadd %s221, 0
          %s228 = smul.addr %s225, 7
          %s229 = smul.addr %s228, 8
          %s230 = scalar_lea.hbm %s0, %s229
          %s231 = sshll.u32 %s230, 4
          %s232 = int_to_ptr.hbm [resolvable:$true] %s231
          %s233 = sshll.u32 %s224, 4
          %s234 = int_to_ptr.vmem [resolvable:$true] %s233
          %239 = dma.hbm_to_vmem [thread:$0]  %s232, 3584, %s234, %s221, 896, 896, 56
        $region36: #{tpu_custom_call.1} parent=31 // pred_fallthru
          _
      $region32: #{tpu_custom_call.1} parent=5 // pred_fallthru
        _
      %p240 = scmp.le.s32.totalorder 1, %s19
      %p241 = scmp.lt.s32.totalorder %s19, 3
      %p242 = pnand %p240, %p241
      %p243 = pneg %p242
      // Predicated region
      $region37: #{tpu_custom_call.1} parent=5 // pred_check
        _
      $region38: #{tpu_custom_call.1} parent=5 // pred_check_branch
        %245 = sbr.rel (%p242) target = $region40
      $region39: #{tpu_custom_call.1} parent=5 // pred_region
        %s246 = ssub.s32 %s19, 1
        %s247 = sand.u32 %s32, 1
        %s248 = scalar_lea.sflag [#allocation3], %s247
        %s249 = sand.u32 %s32, 1
        %s250 = smul.addr %s249, 224
        %s251 = scalar_lea.vmem [#allocation2], %s250
        // Predicated region
        $region41: #{tpu_custom_call.1} parent=39 // pred_check
          %p252 = pneg %p45
        $region42: #{tpu_custom_call.1} parent=39 // pred_check_branch
          %254 = sbr.rel (%p252) target = $region44
        $region43: #{tpu_custom_call.1} parent=39 // pred_region
          %256 = dma.done %s248, 3584
        $region44: #{tpu_custom_call.1} parent=39 // pred_fallthru
          _
        // Predicated region
        $region45: #{tpu_custom_call.1} parent=39 // pred_check
          %p257 = pneg %p66
        $region46: #{tpu_custom_call.1} parent=39 // pred_check_branch
          %259 = sbr.rel (%p257) target = $region48
        $region47: #{tpu_custom_call.1} parent=39 // pred_region
          %261 = dma.done [#allocation6], 25088
        $region48: #{tpu_custom_call.1} parent=39 // pred_fallthru
          _
        // Predicated region
        $region49: #{tpu_custom_call.1} parent=39 // pred_check
          %p262 = pneg %p87
        $region50: #{tpu_custom_call.1} parent=39 // pred_check_branch
          %264 = sbr.rel (%p262) target = $region52
        $region51: #{tpu_custom_call.1} parent=39 // pred_region
          %266 = dma.done [#allocation6], 64
        $region52: #{tpu_custom_call.1} parent=39 // pred_fallthru
          _
        // Predicated region
        $region53: #{tpu_custom_call.1} parent=39 // pred_check
          %p267 = pneg %p108
        $region54: #{tpu_custom_call.1} parent=39 // pred_check_branch
          %269 = sbr.rel (%p267) target = $region56
        $region55: #{tpu_custom_call.1} parent=39 // pred_region
          %271 = dma.done [#allocation9], 4096
        $region56: #{tpu_custom_call.1} parent=39 // pred_fallthru
          _
        %s272 = sand.u32 %s32, 1
        %s273 = scalar_lea.sflag [#allocation3], %s272
        %s274 = sand.u32 %s32, 1
        %s275 = smul.addr %s274, 224
        %s276 = scalar_lea.vmem [#allocation2], %s275
        %p277 = pneg %p45
        %p278 = pneg %p42
        %p279 = pneg %p66
        %p280 = pneg %p63
        %p281 = pneg %p87
        %p282 = pneg %p84
        %p283 = pneg %p108
        %p284 = pneg %p105
        %p285 = pneg %p129
        %p286 = pneg %p126
        %p287 = pneg %p155
        %p288 = pneg %p152
        %s289 = sand.u32 %s142, 1
        %s290 = scalar_lea.sflag [#allocation4], %s289
        %s291 = sand.u32 %s142, 1
        %s292 = smul.addr %s291, 32
        %s293 = scalar_lea.vmem [#allocation10], %s292
        %s294 = smul.u32 4, %s24
        %s295 = smul.u32 4, %s24
        %v296 = vld [vmem:[#allocation5] sm:$0xff]
        %v297 = vld [vmem:[#allocation5 + $0x8] sm:$0xff]
        %v298 = vld [vmem:[#allocation5 + $0x10] sm:$0xff]
        %v299 = vld [vmem:[#allocation5 + $0x18] sm:$0xff]
        %v300 = vld [vmem:[#allocation5 + $0x20] sm:$0xff]
        %v301 = vld [vmem:[#allocation5 + $0x28] sm:$0xff]
        %v302 = vld [vmem:[#allocation5 + $0x30] sm:$0xff]
        %v303 = vld [vmem:[#allocation5 + $0x38] sm:$0xff]
        %v304 = vld [vmem:[#allocation5 + $0x40] sm:$0xff]
        %v305 = vld [vmem:[#allocation5 + $0x48] sm:$0xff]
        %v306 = vld [vmem:[#allocation5 + $0x50] sm:$0xff]
        %v307 = vld [vmem:[#allocation5 + $0x58] sm:$0xff]
        %v308 = vld [vmem:[#allocation5 + $0x60] sm:$0xff]
        %v309 = vld [vmem:[#allocation5 + $0x68] sm:$0xff]
        %v310 = vld [vmem:[#allocation5 + $0x70] sm:$0xff]
        %v311 = vld [vmem:[#allocation5 + $0x78] sm:$0xff]
        %v312 = vld [vmem:[#allocation5 + $0x80] sm:$0xff]
        %v313 = vld [vmem:[#allocation5 + $0x88] sm:$0xff]
        %v314 = vld [vmem:[#allocation5 + $0x90] sm:$0xff]
        %v315 = vld [vmem:[#allocation5 + $0x98] sm:$0xff]
        %v316 = vld [vmem:[#allocation5 + $0xa0] sm:$0xff]
        %v317 = vld [vmem:[#allocation5 + $0xa8] sm:$0xff]
        %v318 = vld [vmem:[#allocation5 + $0xb0] sm:$0xff]
        %v319 = vld [vmem:[#allocation5 + $0xb8] sm:$0xff]
        %v320 = vld [vmem:[#allocation5 + $0xc0] sm:$0xff]
        %v321 = vld [vmem:[#allocation5 + $0xc8] sm:$0xff]
        %v322 = vld [vmem:[#allocation5 + $0xd0] sm:$0xff]
        %v323 = vld [vmem:[#allocation5 + $0xd8] sm:$0xff]
        %v324 = vld [vmem:[#allocation5 + $0xe0] sm:$0xff]
        %v325 = vld [vmem:[#allocation5 + $0xe8] sm:$0xff]
        %v326 = vld [vmem:[#allocation5 + $0xf0] sm:$0xff]
        %v327 = vld [vmem:[#allocation5 + $0xf8] sm:$0xff]
        %v328 = vld [vmem:[#allocation5 + $0x100] sm:$0xff]
        %v329 = vld [vmem:[#allocation5 + $0x108] sm:$0xff]
        %v330 = vld [vmem:[#allocation5 + $0x110] sm:$0xff]
        %v331 = vld [vmem:[#allocation5 + $0x118] sm:$0xff]
        %v332 = vld [vmem:[#allocation5 + $0x120] sm:$0xff]
        %v333 = vld [vmem:[#allocation5 + $0x128] sm:$0xff]
        %v334 = vld [vmem:[#allocation5 + $0x130] sm:$0xff]
        %v335 = vld [vmem:[#allocation5 + $0x138] sm:$0xff]
        %v336 = vld [vmem:[#allocation5 + $0x140] sm:$0xff]
        %v337 = vld [vmem:[#allocation5 + $0x148] sm:$0xff]
        %v338 = vld [vmem:[#allocation5 + $0x150] sm:$0xff]
        %v339 = vld [vmem:[#allocation5 + $0x158] sm:$0xff]
        %v340 = vld [vmem:[#allocation5 + $0x160] sm:$0xff]
        %v341 = vld [vmem:[#allocation5 + $0x168] sm:$0xff]
        %v342 = vld [vmem:[#allocation5 + $0x170] sm:$0xff]
        %v343 = vld [vmem:[#allocation5 + $0x178] sm:$0xff]
        %v344 = vld [vmem:[#allocation5 + $0x180] sm:$0xff]
        %v345 = vld [vmem:[#allocation5 + $0x188] sm:$0xff]
        %v346 = vld [vmem:[#allocation5 + $0x190] sm:$0xff]
        %v347 = vld [vmem:[#allocation5 + $0x198] sm:$0xff]
        %v348 = vld [vmem:[#allocation5 + $0x1a0] sm:$0xff]
        %v349 = vld [vmem:[#allocation5 + $0x1a8] sm:$0xff]
        %v350 = vld [vmem:[#allocation5 + $0x1b0] sm:$0xff]
        %v351 = vld [vmem:[#allocation5 + $0x1b8] sm:$0xff]
        %v352 = vld [vmem:[#allocation5 + $0x1c0] sm:$0xff]
        %v353 = vld [vmem:[#allocation5 + $0x1c8] sm:$0xff]
        %v354 = vld [vmem:[#allocation5 + $0x1d0] sm:$0xff]
        %v355 = vld [vmem:[#allocation5 + $0x1d8] sm:$0xff]
        %v356 = vld [vmem:[#allocation5 + $0x1e0] sm:$0xff]
        %v357 = vld [vmem:[#allocation5 + $0x1e8] sm:$0xff]
        %v358 = vld [vmem:[#allocation5 + $0x1f0] sm:$0xff]
        %v359 = vld [vmem:[#allocation5 + $0x1f8] sm:$0xff]
        %v360 = vld [vmem:[#allocation5 + $0x200] sm:$0xff]
        %v361 = vld [vmem:[#allocation5 + $0x208] sm:$0xff]
        %v362 = vld [vmem:[#allocation5 + $0x210] sm:$0xff]
        %v363 = vld [vmem:[#allocation5 + $0x218] sm:$0xff]
        %v364 = vld [vmem:[#allocation5 + $0x220] sm:$0xff]
        %v365 = vld [vmem:[#allocation5 + $0x228] sm:$0xff]
        %v366 = vld [vmem:[#allocation5 + $0x230] sm:$0xff]
        %v367 = vld [vmem:[#allocation5 + $0x238] sm:$0xff]
        %v368 = vld [vmem:[#allocation5 + $0x240] sm:$0xff]
        %v369 = vld [vmem:[#allocation5 + $0x248] sm:$0xff]
        %v370 = vld [vmem:[#allocation5 + $0x250] sm:$0xff]
        %v371 = vld [vmem:[#allocation5 + $0x258] sm:$0xff]
        %v372 = vld [vmem:[#allocation5 + $0x260] sm:$0xff]
        %v373 = vld [vmem:[#allocation5 + $0x268] sm:$0xff]
        %v374 = vld [vmem:[#allocation5 + $0x270] sm:$0xff]
        %v375 = vld [vmem:[#allocation5 + $0x278] sm:$0xff]
        %v376 = vld [vmem:[#allocation5 + $0x280] sm:$0xff]
        %v377 = vld [vmem:[#allocation5 + $0x288] sm:$0xff]
        %v378 = vld [vmem:[#allocation5 + $0x290] sm:$0xff]
        %v379 = vld [vmem:[#allocation5 + $0x298] sm:$0xff]
        %v380 = vld [vmem:[#allocation5 + $0x2a0] sm:$0xff]
        %v381 = vld [vmem:[#allocation5 + $0x2a8] sm:$0xff]
        %v382 = vld [vmem:[#allocation5 + $0x2b0] sm:$0xff]
        %v383 = vld [vmem:[#allocation5 + $0x2b8] sm:$0xff]
        %v384 = vld [vmem:[#allocation5 + $0x2c0] sm:$0xff]
        %v385 = vld [vmem:[#allocation5 + $0x2c8] sm:$0xff]
        %v386 = vld [vmem:[#allocation5 + $0x2d0] sm:$0xff]
        %v387 = vld [vmem:[#allocation5 + $0x2d8] sm:$0xff]
        %v388 = vld [vmem:[#allocation5 + $0x2e0] sm:$0xff]
        %v389 = vld [vmem:[#allocation5 + $0x2e8] sm:$0xff]
        %v390 = vld [vmem:[#allocation5 + $0x2f0] sm:$0xff]
        %v391 = vld [vmem:[#allocation5 + $0x2f8] sm:$0xff]
        %v392 = vld [vmem:[#allocation5 + $0x300] sm:$0xff]
        %v393 = vld [vmem:[#allocation5 + $0x308] sm:$0xff]
        %v394 = vld [vmem:[#allocation5 + $0x310] sm:$0xff]
        %v395 = vld [vmem:[#allocation5 + $0x318] sm:$0xff]
        %v396 = vld [vmem:[#allocation5 + $0x320] sm:$0xff]
        %v397 = vld [vmem:[#allocation5 + $0x328] sm:$0xff]
        %v398 = vld [vmem:[#allocation5 + $0x330] sm:$0xff]
        %v399 = vld [vmem:[#allocation5 + $0x338] sm:$0xff]
        %v400 = vld [vmem:[#allocation5 + $0x340] sm:$0xff]
        %v401 = vld [vmem:[#allocation5 + $0x348] sm:$0xff]
        %v402 = vld [vmem:[#allocation5 + $0x350] sm:$0xff]
        %v403 = vld [vmem:[#allocation5 + $0x358] sm:$0xff]
        %v404 = vld [vmem:[#allocation5 + $0x360] sm:$0xff]
        %v405 = vld [vmem:[#allocation5 + $0x368] sm:$0xff]
        %v406 = vld [vmem:[#allocation5 + $0x370] sm:$0xff]
        %v407 = vld [vmem:[#allocation5 + $0x378] sm:$0xff]
        %v408 = vld [vmem:[#allocation5 + $0x380] sm:$0xff]
        %v409 = vld [vmem:[#allocation5 + $0x388] sm:$0xff]
        %v410 = vld [vmem:[#allocation5 + $0x390] sm:$0xff]
        %v411 = vld [vmem:[#allocation5 + $0x398] sm:$0xff]
        %v412 = vld [vmem:[#allocation5 + $0x3a0] sm:$0xff]
        %v413 = vld [vmem:[#allocation5 + $0x3a8] sm:$0xff]
        %v414 = vld [vmem:[#allocation5 + $0x3b0] sm:$0xff]
        %v415 = vld [vmem:[#allocation5 + $0x3b8] sm:$0xff]
        %v416 = vld [vmem:[#allocation5 + $0x3c0] sm:$0xff]
        %v417 = vld [vmem:[#allocation5 + $0x3c8] sm:$0xff]
        %v418 = vld [vmem:[#allocation5 + $0x3d0] sm:$0xff]
        %v419 = vld [vmem:[#allocation5 + $0x3d8] sm:$0xff]
        %v420 = vld [vmem:[#allocation5 + $0x3e0] sm:$0xff]
        %v421 = vld [vmem:[#allocation5 + $0x3e8] sm:$0xff]
        %v422 = vld [vmem:[#allocation5 + $0x3f0] sm:$0xff]
        %v423 = vld [vmem:[#allocation5 + $0x3f8] sm:$0xff]
        %v424 = vld [vmem:[#allocation5 + $0x400] sm:$0xff]
        %v425 = vld [vmem:[#allocation5 + $0x408] sm:$0xff]
        %v426 = vld [vmem:[#allocation5 + $0x410] sm:$0xff]
        %v427 = vld [vmem:[#allocation5 + $0x418] sm:$0xff]
        %v428 = vld [vmem:[#allocation5 + $0x420] sm:$0xff]
        %v429 = vld [vmem:[#allocation5 + $0x428] sm:$0xff]
        %v430 = vld [vmem:[#allocation5 + $0x430] sm:$0xff]
        %v431 = vld [vmem:[#allocation5 + $0x438] sm:$0xff]
        %v432 = vld [vmem:[#allocation5 + $0x440] sm:$0xff]
        %v433 = vld [vmem:[#allocation5 + $0x448] sm:$0xff]
        %v434 = vld [vmem:[#allocation5 + $0x450] sm:$0xff]
        %v435 = vld [vmem:[#allocation5 + $0x458] sm:$0xff]
        %v436 = vld [vmem:[#allocation5 + $0x460] sm:$0xff]
        %v437 = vld [vmem:[#allocation5 + $0x468] sm:$0xff]
        %v438 = vld [vmem:[#allocation5 + $0x470] sm:$0xff]
        %v439 = vld [vmem:[#allocation5 + $0x478] sm:$0xff]
        %v440 = vld [vmem:[#allocation5 + $0x480] sm:$0xff]
        %v441 = vld [vmem:[#allocation5 + $0x488] sm:$0xff]
        %v442 = vld [vmem:[#allocation5 + $0x490] sm:$0xff]
        %v443 = vld [vmem:[#allocation5 + $0x498] sm:$0xff]
        %v444 = vld [vmem:[#allocation5 + $0x4a0] sm:$0xff]
        %v445 = vld [vmem:[#allocation5 + $0x4a8] sm:$0xff]
        %v446 = vld [vmem:[#allocation5 + $0x4b0] sm:$0xff]
        %v447 = vld [vmem:[#allocation5 + $0x4b8] sm:$0xff]
        %v448 = vld [vmem:[#allocation5 + $0x4c0] sm:$0xff]
        %v449 = vld [vmem:[#allocation5 + $0x4c8] sm:$0xff]
        %v450 = vld [vmem:[#allocation5 + $0x4d0] sm:$0xff]
        %v451 = vld [vmem:[#allocation5 + $0x4d8] sm:$0xff]
        %v452 = vld [vmem:[#allocation5 + $0x4e0] sm:$0xff]
        %v453 = vld [vmem:[#allocation5 + $0x4e8] sm:$0xff]
        %v454 = vld [vmem:[#allocation5 + $0x4f0] sm:$0xff]
        %v455 = vld [vmem:[#allocation5 + $0x4f8] sm:$0xff]
        %v456 = vld [vmem:[#allocation5 + $0x500] sm:$0xff]
        %v457 = vld [vmem:[#allocation5 + $0x508] sm:$0xff]
        %v458 = vld [vmem:[#allocation5 + $0x510] sm:$0xff]
        %v459 = vld [vmem:[#allocation5 + $0x518] sm:$0xff]
        %v460 = vld [vmem:[#allocation5 + $0x520] sm:$0xff]
        %v461 = vld [vmem:[#allocation5 + $0x528] sm:$0xff]
        %v462 = vld [vmem:[#allocation5 + $0x530] sm:$0xff]
        %v463 = vld [vmem:[#allocation5 + $0x538] sm:$0xff]
        %v464 = vld [vmem:[#allocation5 + $0x540] sm:$0xff]
        %v465 = vld [vmem:[#allocation5 + $0x548] sm:$0xff]
        %v466 = vld [vmem:[#allocation5 + $0x550] sm:$0xff]
        %v467 = vld [vmem:[#allocation5 + $0x558] sm:$0xff]
        %v468 = vld [vmem:[#allocation5 + $0x560] sm:$0xff]
        %v469 = vld [vmem:[#allocation5 + $0x568] sm:$0xff]
        %v470 = vld [vmem:[#allocation5 + $0x570] sm:$0xff]
        %v471 = vld [vmem:[#allocation5 + $0x578] sm:$0xff]
        %v472 = vld [vmem:[#allocation5 + $0x580] sm:$0xff]
        %v473 = vld [vmem:[#allocation5 + $0x588] sm:$0xff]
        %v474 = vld [vmem:[#allocation5 + $0x590] sm:$0xff]
        %v475 = vld [vmem:[#allocation5 + $0x598] sm:$0xff]
        %v476 = vld [vmem:[#allocation5 + $0x5a0] sm:$0xff]
        %v477 = vld [vmem:[#allocation5 + $0x5a8] sm:$0xff]
        %v478 = vld [vmem:[#allocation5 + $0x5b0] sm:$0xff]
        %v479 = vld [vmem:[#allocation5 + $0x5b8] sm:$0xff]
        %v480 = vld [vmem:[#allocation5 + $0x5c0] sm:$0xff]
        %v481 = vld [vmem:[#allocation5 + $0x5c8] sm:$0xff]
        %v482 = vld [vmem:[#allocation5 + $0x5d0] sm:$0xff]
        %v483 = vld [vmem:[#allocation5 + $0x5d8] sm:$0xff]
        %v484 = vld [vmem:[#allocation5 + $0x5e0] sm:$0xff]
        %v485 = vld [vmem:[#allocation5 + $0x5e8] sm:$0xff]
        %v486 = vld [vmem:[#allocation5 + $0x5f0] sm:$0xff]
        %v487 = vld [vmem:[#allocation5 + $0x5f8] sm:$0xff]
        %v488 = vld [vmem:[#allocation5 + $0x600] sm:$0xff]
        %v489 = vld [vmem:[#allocation5 + $0x608] sm:$0xff]
        %v490 = vld [vmem:[#allocation5 + $0x610] sm:$0xff]
        %v491 = vld [vmem:[#allocation5 + $0x618] sm:$0xff]
        %v492 = vunpack.c.l.bf16 %v296
        %v493 = vunpack.c.h.bf16 %v296
        %v494 = vunpack.c.l.bf16 %v297
        %v495 = vunpack.c.h.bf16 %v297
        %v496 = vunpack.c.l.bf16 %v298
        %v497 = vunpack.c.h.bf16 %v298
        %v498 = vunpack.c.l.bf16 %v299
        %v499 = vunpack.c.h.bf16 %v299
        %v500 = vunpack.c.l.bf16 %v300
        %v501 = vunpack.c.h.bf16 %v300
        %v502 = vunpack.c.l.bf16 %v301
        %v503 = vunpack.c.h.bf16 %v301
        %v504 = vunpack.c.l.bf16 %v302
        %v505 = vunpack.c.h.bf16 %v302
        %v506 = vunpack.c.l.bf16 %v303
        %v507 = vunpack.c.h.bf16 %v303
        %v508 = vunpack.c.l.bf16 %v304
        %v509 = vunpack.c.h.bf16 %v304
        %v510 = vunpack.c.l.bf16 %v305
        %v511 = vunpack.c.h.bf16 %v305
        %v512 = vunpack.c.l.bf16 %v306
        %v513 = vunpack.c.h.bf16 %v306
        %v514 = vunpack.c.l.bf16 %v307
        %v515 = vunpack.c.h.bf16 %v307
        %v516 = vunpack.c.l.bf16 %v308
        %v517 = vunpack.c.h.bf16 %v308
        %v518 = vunpack.c.l.bf16 %v309
        %v519 = vunpack.c.h.bf16 %v309
        %v520 = vunpack.c.l.bf16 %v310
        %v521 = vunpack.c.h.bf16 %v310
        %v522 = vunpack.c.l.bf16 %v311
        %v523 = vunpack.c.h.bf16 %v311
        %v524 = vunpack.c.l.bf16 %v312
        %v525 = vunpack.c.h.bf16 %v312
        %v526 = vunpack.c.l.bf16 %v313
        %v527 = vunpack.c.h.bf16 %v313
        %v528 = vunpack.c.l.bf16 %v314
        %v529 = vunpack.c.h.bf16 %v314
        %v530 = vunpack.c.l.bf16 %v315
        %v531 = vunpack.c.h.bf16 %v315
        %v532 = vunpack.c.l.bf16 %v316
        %v533 = vunpack.c.h.bf16 %v316
        %v534 = vunpack.c.l.bf16 %v317
        %v535 = vunpack.c.h.bf16 %v317
        %v536 = vunpack.c.l.bf16 %v318
        %v537 = vunpack.c.h.bf16 %v318
        %v538 = vunpack.c.l.bf16 %v319
        %v539 = vunpack.c.h.bf16 %v319
        %v540 = vunpack.c.l.bf16 %v320
        %v541 = vunpack.c.h.bf16 %v320
        %v542 = vunpack.c.l.bf16 %v321
        %v543 = vunpack.c.h.bf16 %v321
        %v544 = vunpack.c.l.bf16 %v322
        %v545 = vunpack.c.h.bf16 %v322
        %v546 = vunpack.c.l.bf16 %v323
        %v547 = vunpack.c.h.bf16 %v323
        %v548 = vunpack.c.l.bf16 %v324
        %v549 = vunpack.c.h.bf16 %v324
        %v550 = vunpack.c.l.bf16 %v325
        %v551 = vunpack.c.h.bf16 %v325
        %v552 = vunpack.c.l.bf16 %v326
        %v553 = vunpack.c.h.bf16 %v326
        %v554 = vunpack.c.l.bf16 %v327
        %v555 = vunpack.c.h.bf16 %v327
        %v556 = vunpack.c.l.bf16 %v328
        %v557 = vunpack.c.h.bf16 %v328
        %v558 = vunpack.c.l.bf16 %v329
        %v559 = vunpack.c.h.bf16 %v329
        %v560 = vunpack.c.l.bf16 %v330
        %v561 = vunpack.c.h.bf16 %v330
        %v562 = vunpack.c.l.bf16 %v331
        %v563 = vunpack.c.h.bf16 %v331
        %v564 = vunpack.c.l.bf16 %v332
        %v565 = vunpack.c.h.bf16 %v332
        %v566 = vunpack.c.l.bf16 %v333
        %v567 = vunpack.c.h.bf16 %v333
        %v568 = vunpack.c.l.bf16 %v334
        %v569 = vunpack.c.h.bf16 %v334
        %v570 = vunpack.c.l.bf16 %v335
        %v571 = vunpack.c.h.bf16 %v335
        %v572 = vunpack.c.l.bf16 %v336
        %v573 = vunpack.c.h.bf16 %v336
        %v574 = vunpack.c.l.bf16 %v337
        %v575 = vunpack.c.h.bf16 %v337
        %v576 = vunpack.c.l.bf16 %v338
        %v577 = vunpack.c.h.bf16 %v338
        %v578 = vunpack.c.l.bf16 %v339
        %v579 = vunpack.c.h.bf16 %v339
        %v580 = vunpack.c.l.bf16 %v340
        %v581 = vunpack.c.h.bf16 %v340
        %v582 = vunpack.c.l.bf16 %v341
        %v583 = vunpack.c.h.bf16 %v341
        %v584 = vunpack.c.l.bf16 %v342
        %v585 = vunpack.c.h.bf16 %v342
        %v586 = vunpack.c.l.bf16 %v343
        %v587 = vunpack.c.h.bf16 %v343
        %v588 = vunpack.c.l.bf16 %v344
        %v589 = vunpack.c.h.bf16 %v344
        %v590 = vunpack.c.l.bf16 %v345
        %v591 = vunpack.c.h.bf16 %v345
        %v592 = vunpack.c.l.bf16 %v346
        %v593 = vunpack.c.h.bf16 %v346
        %v594 = vunpack.c.l.bf16 %v347
        %v595 = vunpack.c.h.bf16 %v347
        %v596 = vunpack.c.l.bf16 %v348
        %v597 = vunpack.c.h.bf16 %v348
        %v598 = vunpack.c.l.bf16 %v349
        %v599 = vunpack.c.h.bf16 %v349
        %v600 = vunpack.c.l.bf16 %v350
        %v601 = vunpack.c.h.bf16 %v350
        %v602 = vunpack.c.l.bf16 %v351
        %v603 = vunpack.c.h.bf16 %v351
        %v604 = vunpack.c.l.bf16 %v352
        %v605 = vunpack.c.h.bf16 %v352
        %v606 = vunpack.c.l.bf16 %v353
        %v607 = vunpack.c.h.bf16 %v353
        %v608 = vunpack.c.l.bf16 %v354
        %v609 = vunpack.c.h.bf16 %v354
        %v610 = vunpack.c.l.bf16 %v355
        %v611 = vunpack.c.h.bf16 %v355
        %v612 = vunpack.c.l.bf16 %v356
        %v613 = vunpack.c.h.bf16 %v356
        %v614 = vunpack.c.l.bf16 %v357
        %v615 = vunpack.c.h.bf16 %v357
        %v616 = vunpack.c.l.bf16 %v358
        %v617 = vunpack.c.h.bf16 %v358
        %v618 = vunpack.c.l.bf16 %v359
        %v619 = vunpack.c.h.bf16 %v359
        %v620 = vunpack.c.l.bf16 %v360
        %v621 = vunpack.c.h.bf16 %v360
        %v622 = vunpack.c.l.bf16 %v361
        %v623 = vunpack.c.h.bf16 %v361
        %v624 = vunpack.c.l.bf16 %v362
        %v625 = vunpack.c.h.bf16 %v362
        %v626 = vunpack.c.l.bf16 %v363
        %v627 = vunpack.c.h.bf16 %v363
        %v628 = vunpack.c.l.bf16 %v364
        %v629 = vunpack.c.h.bf16 %v364
        %v630 = vunpack.c.l.bf16 %v365
        %v631 = vunpack.c.h.bf16 %v365
        %v632 = vunpack.c.l.bf16 %v366
        %v633 = vunpack.c.h.bf16 %v366
        %v634 = vunpack.c.l.bf16 %v367
        %v635 = vunpack.c.h.bf16 %v367
        %v636 = vunpack.c.l.bf16 %v368
        %v637 = vunpack.c.h.bf16 %v368
        %v638 = vunpack.c.l.bf16 %v369
        %v639 = vunpack.c.h.bf16 %v369
        %v640 = vunpack.c.l.bf16 %v370
        %v641 = vunpack.c.h.bf16 %v370
        %v642 = vunpack.c.l.bf16 %v371
        %v643 = vunpack.c.h.bf16 %v371
        %v644 = vunpack.c.l.bf16 %v372
        %v645 = vunpack.c.h.bf16 %v372
        %v646 = vunpack.c.l.bf16 %v373
        %v647 = vunpack.c.h.bf16 %v373
        %v648 = vunpack.c.l.bf16 %v374
        %v649 = vunpack.c.h.bf16 %v374
        %v650 = vunpack.c.l.bf16 %v375
        %v651 = vunpack.c.h.bf16 %v375
        %v652 = vunpack.c.l.bf16 %v376
        %v653 = vunpack.c.h.bf16 %v376
        %v654 = vunpack.c.l.bf16 %v377
        %v655 = vunpack.c.h.bf16 %v377
        %v656 = vunpack.c.l.bf16 %v378
        %v657 = vunpack.c.h.bf16 %v378
        %v658 = vunpack.c.l.bf16 %v379
        %v659 = vunpack.c.h.bf16 %v379
        %v660 = vunpack.c.l.bf16 %v380
        %v661 = vunpack.c.h.bf16 %v380
        %v662 = vunpack.c.l.bf16 %v381
        %v663 = vunpack.c.h.bf16 %v381
        %v664 = vunpack.c.l.bf16 %v382
        %v665 = vunpack.c.h.bf16 %v382
        %v666 = vunpack.c.l.bf16 %v383
        %v667 = vunpack.c.h.bf16 %v383
        %v668 = vunpack.c.l.bf16 %v384
        %v669 = vunpack.c.h.bf16 %v384
        %v670 = vunpack.c.l.bf16 %v385
        %v671 = vunpack.c.h.bf16 %v385
        %v672 = vunpack.c.l.bf16 %v386
        %v673 = vunpack.c.h.bf16 %v386
        %v674 = vunpack.c.l.bf16 %v387
        %v675 = vunpack.c.h.bf16 %v387
        %v676 = vunpack.c.l.bf16 %v388
        %v677 = vunpack.c.h.bf16 %v388
        %v678 = vunpack.c.l.bf16 %v389
        %v679 = vunpack.c.h.bf16 %v389
        %v680 = vunpack.c.l.bf16 %v390
        %v681 = vunpack.c.h.bf16 %v390
        %v682 = vunpack.c.l.bf16 %v391
        %v683 = vunpack.c.h.bf16 %v391
        %v684 = vunpack.c.l.bf16 %v392
        %v685 = vunpack.c.h.bf16 %v392
        %v686 = vunpack.c.l.bf16 %v393
        %v687 = vunpack.c.h.bf16 %v393
        %v688 = vunpack.c.l.bf16 %v394
        %v689 = vunpack.c.h.bf16 %v394
        %v690 = vunpack.c.l.bf16 %v395
        %v691 = vunpack.c.h.bf16 %v395
        %v692 = vunpack.c.l.bf16 %v396
        %v693 = vunpack.c.h.bf16 %v396
        %v694 = vunpack.c.l.bf16 %v397
        %v695 = vunpack.c.h.bf16 %v397
        %v696 = vunpack.c.l.bf16 %v398
        %v697 = vunpack.c.h.bf16 %v398
        %v698 = vunpack.c.l.bf16 %v399
        %v699 = vunpack.c.h.bf16 %v399
        %v700 = vunpack.c.l.bf16 %v400
        %v701 = vunpack.c.h.bf16 %v400
        %v702 = vunpack.c.l.bf16 %v401
        %v703 = vunpack.c.h.bf16 %v401
        %v704 = vunpack.c.l.bf16 %v402
        %v705 = vunpack.c.h.bf16 %v402
        %v706 = vunpack.c.l.bf16 %v403
        %v707 = vunpack.c.h.bf16 %v403
        %v708 = vunpack.c.l.bf16 %v404
        %v709 = vunpack.c.h.bf16 %v404
        %v710 = vunpack.c.l.bf16 %v405
        %v711 = vunpack.c.h.bf16 %v405
        %v712 = vunpack.c.l.bf16 %v406
        %v713 = vunpack.c.h.bf16 %v406
        %v714 = vunpack.c.l.bf16 %v407
        %v715 = vunpack.c.h.bf16 %v407
        %v716 = vunpack.c.l.bf16 %v408
        %v717 = vunpack.c.h.bf16 %v408
        %v718 = vunpack.c.l.bf16 %v409
        %v719 = vunpack.c.h.bf16 %v409
        %v720 = vunpack.c.l.bf16 %v410
        %v721 = vunpack.c.h.bf16 %v410
        %v722 = vunpack.c.l.bf16 %v411
        %v723 = vunpack.c.h.bf16 %v411
        %v724 = vunpack.c.l.bf16 %v412
        %v725 = vunpack.c.h.bf16 %v412
        %v726 = vunpack.c.l.bf16 %v413
        %v727 = vunpack.c.h.bf16 %v413
        %v728 = vunpack.c.l.bf16 %v414
        %v729 = vunpack.c.h.bf16 %v414
        %v730 = vunpack.c.l.bf16 %v415
        %v731 = vunpack.c.h.bf16 %v415
        %v732 = vunpack.c.l.bf16 %v416
        %v733 = vunpack.c.h.bf16 %v416
        %v734 = vunpack.c.l.bf16 %v417
        %v735 = vunpack.c.h.bf16 %v417
        %v736 = vunpack.c.l.bf16 %v418
        %v737 = vunpack.c.h.bf16 %v418
        %v738 = vunpack.c.l.bf16 %v419
        %v739 = vunpack.c.h.bf16 %v419
        %v740 = vunpack.c.l.bf16 %v420
        %v741 = vunpack.c.h.bf16 %v420
        %v742 = vunpack.c.l.bf16 %v421
        %v743 = vunpack.c.h.bf16 %v421
        %v744 = vunpack.c.l.bf16 %v422
        %v745 = vunpack.c.h.bf16 %v422
        %v746 = vunpack.c.l.bf16 %v423
        %v747 = vunpack.c.h.bf16 %v423
        %v748 = vunpack.c.l.bf16 %v424
        %v749 = vunpack.c.h.bf16 %v424
        %v750 = vunpack.c.l.bf16 %v425
        %v751 = vunpack.c.h.bf16 %v425
        %v752 = vunpack.c.l.bf16 %v426
        %v753 = vunpack.c.h.bf16 %v426
        %v754 = vunpack.c.l.bf16 %v427
        %v755 = vunpack.c.h.bf16 %v427
        %v756 = vunpack.c.l.bf16 %v428
        %v757 = vunpack.c.h.bf16 %v428
        %v758 = vunpack.c.l.bf16 %v429
        %v759 = vunpack.c.h.bf16 %v429
        %v760 = vunpack.c.l.bf16 %v430
        %v761 = vunpack.c.h.bf16 %v430
        %v762 = vunpack.c.l.bf16 %v431
        %v763 = vunpack.c.h.bf16 %v431
        %v764 = vunpack.c.l.bf16 %v432
        %v765 = vunpack.c.h.bf16 %v432
        %v766 = vunpack.c.l.bf16 %v433
        %v767 = vunpack.c.h.bf16 %v433
        %v768 = vunpack.c.l.bf16 %v434
        %v769 = vunpack.c.h.bf16 %v434
        %v770 = vunpack.c.l.bf16 %v435
        %v771 = vunpack.c.h.bf16 %v435
        %v772 = vunpack.c.l.bf16 %v436
        %v773 = vunpack.c.h.bf16 %v436
        %v774 = vunpack.c.l.bf16 %v437
        %v775 = vunpack.c.h.bf16 %v437
        %v776 = vunpack.c.l.bf16 %v438
        %v777 = vunpack.c.h.bf16 %v438
        %v778 = vunpack.c.l.bf16 %v439
        %v779 = vunpack.c.h.bf16 %v439
        %v780 = vunpack.c.l.bf16 %v440
        %v781 = vunpack.c.h.bf16 %v440
        %v782 = vunpack.c.l.bf16 %v441
        %v783 = vunpack.c.h.bf16 %v441
        %v784 = vunpack.c.l.bf16 %v442
        %v785 = vunpack.c.h.bf16 %v442
        %v786 = vunpack.c.l.bf16 %v443
        %v787 = vunpack.c.h.bf16 %v443
        %v788 = vunpack.c.l.bf16 %v444
        %v789 = vunpack.c.h.bf16 %v444
        %v790 = vunpack.c.l.bf16 %v445
        %v791 = vunpack.c.h.bf16 %v445
        %v792 = vunpack.c.l.bf16 %v446
        %v793 = vunpack.c.h.bf16 %v446
        %v794 = vunpack.c.l.bf16 %v447
        %v795 = vunpack.c.h.bf16 %v447
        %v796 = vunpack.c.l.bf16 %v448
        %v797 = vunpack.c.h.bf16 %v448
        %v798 = vunpack.c.l.bf16 %v449
        %v799 = vunpack.c.h.bf16 %v449
        %v800 = vunpack.c.l.bf16 %v450
        %v801 = vunpack.c.h.bf16 %v450
        %v802 = vunpack.c.l.bf16 %v451
        %v803 = vunpack.c.h.bf16 %v451
        %v804 = vunpack.c.l.bf16 %v452
        %v805 = vunpack.c.h.bf16 %v452
        %v806 = vunpack.c.l.bf16 %v453
        %v807 = vunpack.c.h.bf16 %v453
        %v808 = vunpack.c.l.bf16 %v454
        %v809 = vunpack.c.h.bf16 %v454
        %v810 = vunpack.c.l.bf16 %v455
        %v811 = vunpack.c.h.bf16 %v455
        %v812 = vunpack.c.l.bf16 %v456
        %v813 = vunpack.c.h.bf16 %v456
        %v814 = vunpack.c.l.bf16 %v457
        %v815 = vunpack.c.h.bf16 %v457
        %v816 = vunpack.c.l.bf16 %v458
        %v817 = vunpack.c.h.bf16 %v458
        %v818 = vunpack.c.l.bf16 %v459
        %v819 = vunpack.c.h.bf16 %v459
        %v820 = vunpack.c.l.bf16 %v460
        %v821 = vunpack.c.h.bf16 %v460
        %v822 = vunpack.c.l.bf16 %v461
        %v823 = vunpack.c.h.bf16 %v461
        %v824 = vunpack.c.l.bf16 %v462
        %v825 = vunpack.c.h.bf16 %v462
        %v826 = vunpack.c.l.bf16 %v463
        %v827 = vunpack.c.h.bf16 %v463
        %v828 = vunpack.c.l.bf16 %v464
        %v829 = vunpack.c.h.bf16 %v464
        %v830 = vunpack.c.l.bf16 %v465
        %v831 = vunpack.c.h.bf16 %v465
        %v832 = vunpack.c.l.bf16 %v466
        %v833 = vunpack.c.h.bf16 %v466
        %v834 = vunpack.c.l.bf16 %v467
        %v835 = vunpack.c.h.bf16 %v467
        %v836 = vunpack.c.l.bf16 %v468
        %v837 = vunpack.c.h.bf16 %v468
        %v838 = vunpack.c.l.bf16 %v469
        %v839 = vunpack.c.h.bf16 %v469
        %v840 = vunpack.c.l.bf16 %v470
        %v841 = vunpack.c.h.bf16 %v470
        %v842 = vunpack.c.l.bf16 %v471
        %v843 = vunpack.c.h.bf16 %v471
        %v844 = vunpack.c.l.bf16 %v472
        %v845 = vunpack.c.h.bf16 %v472
        %v846 = vunpack.c.l.bf16 %v473
        %v847 = vunpack.c.h.bf16 %v473
        %v848 = vunpack.c.l.bf16 %v474
        %v849 = vunpack.c.h.bf16 %v474
        %v850 = vunpack.c.l.bf16 %v475
        %v851 = vunpack.c.h.bf16 %v475
        %v852 = vunpack.c.l.bf16 %v476
        %v853 = vunpack.c.h.bf16 %v476
        %v854 = vunpack.c.l.bf16 %v477
        %v855 = vunpack.c.h.bf16 %v477
        %v856 = vunpack.c.l.bf16 %v478
        %v857 = vunpack.c.h.bf16 %v478
        %v858 = vunpack.c.l.bf16 %v479
        %v859 = vunpack.c.h.bf16 %v479
        %v860 = vunpack.c.l.bf16 %v480
        %v861 = vunpack.c.h.bf16 %v480
        %v862 = vunpack.c.l.bf16 %v481
        %v863 = vunpack.c.h.bf16 %v481
        %v864 = vunpack.c.l.bf16 %v482
        %v865 = vunpack.c.h.bf16 %v482
        %v866 = vunpack.c.l.bf16 %v483
        %v867 = vunpack.c.h.bf16 %v483
        %v868 = vunpack.c.l.bf16 %v484
        %v869 = vunpack.c.h.bf16 %v484
        %v870 = vunpack.c.l.bf16 %v485
        %v871 = vunpack.c.h.bf16 %v485
        %v872 = vunpack.c.l.bf16 %v486
        %v873 = vunpack.c.h.bf16 %v486
        %v874 = vunpack.c.l.bf16 %v487
        %v875 = vunpack.c.h.bf16 %v487
        %v876 = vunpack.c.l.bf16 %v488
        %v877 = vunpack.c.h.bf16 %v488
        %v878 = vunpack.c.l.bf16 %v489
        %v879 = vunpack.c.h.bf16 %v489
        %v880 = vunpack.c.l.bf16 %v490
        %v881 = vunpack.c.h.bf16 %v490
        %v882 = vunpack.c.l.bf16 %v491
        %v883 = vunpack.c.h.bf16 %v491
        %v884 = vld [vmem:[%s251] sm:$0xff]
        %v885 = vld [vmem:[%s251 + $0x8] sm:$0xff]
        %v886 = vld [vmem:[%s251 + $0x10] sm:$0xff]
        %v887 = vld [vmem:[%s251 + $0x18] sm:$0xff]
        %v888 = vld [vmem:[%s251 + $0x20] sm:$0xff]
        %v889 = vld [vmem:[%s251 + $0x28] sm:$0xff]
        %v890 = vld [vmem:[%s251 + $0x30] sm:$0xff]
        %v891 = vld [vmem:[%s251 + $0x38] sm:$0xff]
        %v892 = vld [vmem:[%s251 + $0x40] sm:$0xff]
        %v893 = vld [vmem:[%s251 + $0x48] sm:$0xff]
        %v894 = vld [vmem:[%s251 + $0x50] sm:$0xff]
        %v895 = vld [vmem:[%s251 + $0x58] sm:$0xff]
        %v896 = vld [vmem:[%s251 + $0x60] sm:$0xff]
        %v897 = vld [vmem:[%s251 + $0x68] sm:$0xff]
        %v898 = vld [vmem:[%s251 + $0x70] sm:$0xff]
        %v899 = vld [vmem:[%s251 + $0x78] sm:$0xff]
        %v900 = vld [vmem:[%s251 + $0x80] sm:$0xff]
        %v901 = vld [vmem:[%s251 + $0x88] sm:$0xff]
        %v902 = vld [vmem:[%s251 + $0x90] sm:$0xff]
        %v903 = vld [vmem:[%s251 + $0x98] sm:$0xff]
        %v904 = vld [vmem:[%s251 + $0xa0] sm:$0xff]
        %v905 = vld [vmem:[%s251 + $0xa8] sm:$0xff]
        %v906 = vld [vmem:[%s251 + $0xb0] sm:$0xff]
        %v907 = vld [vmem:[%s251 + $0xb8] sm:$0xff]
        %v908 = vld [vmem:[%s251 + $0xc0] sm:$0xff]
        %v909 = vld [vmem:[%s251 + $0xc8] sm:$0xff]
        %v910 = vld [vmem:[%s251 + $0xd0] sm:$0xff]
        %v911 = vld [vmem:[%s251 + $0xd8] sm:$0xff]
        %v912 = vld [vmem:[#allocation7] sm:$0xf]
        %v914 = vperm.slane %v912, 0
        %v915 = vperm.slane %v912, 1
        %v916 = vperm.slane %v912, 2
        %v917 = vperm.slane %v912, 3
        %vm922 = vcmask 130048
        %v924 = vsel %vm922, %v890, 0
        %v927 = vsel %vm922, %v897, 0
        %v930 = vsel %vm922, %v904, 0
        %v933 = vsel %vm922, %v911, 0
        %935 = vmatpush.msra.mxu0 %v552
        %936 = vmatpush.msra.mxu0 %v548
        %937 = vmatpush.msra.mxu0 %v544
        %938 = vmatpush.msra.mxu0 %v540
        %939 = vmatpush.msra.mxu0 %v536
        %940 = vmatpush.msra.mxu0 %v532
        %941 = vmatpush.msra.mxu0 %v528
        %942 = vmatpush.msra.mxu0 %v524
        %943 = vmatpush.msra.mxu0 %v520
        %944 = vmatpush.msra.mxu0 %v516
        %945 = vmatpush.msra.mxu0 %v512
        %946 = vmatpush.msra.mxu0 %v508
        %947 = vmatpush.msra.mxu0 %v504
        %948 = vmatpush.msra.mxu0 %v500
        %949 = vmatpush.msra.mxu0 %v496
        %950 = vmatpush.msra.mxu0 %v492
        %951 = vmatmul.f32.gmra.mxu0 %v884
        %v952 = vpop.f32.mrf.mxu0
        %v953 = vadd.f32 %v914, %v952
        %954 = vmatmul.f32.gmra.mxu0 %v891
        %v955 = vpop.f32.mrf.mxu0
        %v956 = vadd.f32 %v914, %v955
        %957 = vmatmul.f32.gmra.mxu0 %v898
        %v958 = vpop.f32.mrf.mxu0
        %v959 = vadd.f32 %v914, %v958
        %960 = vmatmul.f32.gmra.mxu0 %v905
        %v961 = vpop.f32.mrf.mxu0
        %v962 = vadd.f32 %v914, %v961
        %963 = vdwg.mxu0
        %964 = vmatpush.msra.mxu0 %v616
        %965 = vmatpush.msra.mxu0 %v612
        %966 = vmatpush.msra.mxu0 %v608
        %967 = vmatpush.msra.mxu0 %v604
        %968 = vmatpush.msra.mxu0 %v600
        %969 = vmatpush.msra.mxu0 %v596
        %970 = vmatpush.msra.mxu0 %v592
        %971 = vmatpush.msra.mxu0 %v588
        %972 = vmatpush.msra.mxu0 %v584
        %973 = vmatpush.msra.mxu0 %v580
        %974 = vmatpush.msra.mxu0 %v576
        %975 = vmatpush.msra.mxu0 %v572
        %976 = vmatpush.msra.mxu0 %v568
        %977 = vmatpush.msra.mxu0 %v564
        %978 = vmatpush.msra.mxu0 %v560
        %979 = vmatpush.msra.mxu0 %v556
        %980 = vmatmul.f32.gmra.mxu0 %v885
        %v981 = vpop.f32.mrf.mxu0
        %v982 = vadd.f32 %v953, %v981
        %983 = vmatmul.f32.gmra.mxu0 %v892
        %v984 = vpop.f32.mrf.mxu0
        %v985 = vadd.f32 %v956, %v984
        %986 = vmatmul.f32.gmra.mxu0 %v899
        %v987 = vpop.f32.mrf.mxu0
        %v988 = vadd.f32 %v959, %v987
        %989 = vmatmul.f32.gmra.mxu0 %v906
        %v990 = vpop.f32.mrf.mxu0
        %v991 = vadd.f32 %v962, %v990
        %992 = vdwg.mxu0
        %993 = vmatpush.msra.mxu0 %v680
        %994 = vmatpush.msra.mxu0 %v676
        %995 = vmatpush.msra.mxu0 %v672
        %996 = vmatpush.msra.mxu0 %v668
        %997 = vmatpush.msra.mxu0 %v664
        %998 = vmatpush.msra.mxu0 %v660
        %999 = vmatpush.msra.mxu0 %v656
        %1000 = vmatpush.msra.mxu0 %v652
        %1001 = vmatpush.msra.mxu0 %v648
        %1002 = vmatpush.msra.mxu0 %v644
        %1003 = vmatpush.msra.mxu0 %v640
        %1004 = vmatpush.msra.mxu0 %v636
        %1005 = vmatpush.msra.mxu0 %v632
        %1006 = vmatpush.msra.mxu0 %v628
        %1007 = vmatpush.msra.mxu0 %v624
        %1008 = vmatpush.msra.mxu0 %v620
        %1009 = vmatmul.f32.gmra.mxu0 %v886
        %v1010 = vpop.f32.mrf.mxu0
        %v1011 = vadd.f32 %v982, %v1010
        %1012 = vmatmul.f32.gmra.mxu0 %v893
        %v1013 = vpop.f32.mrf.mxu0
        %v1014 = vadd.f32 %v985, %v1013
        %1015 = vmatmul.f32.gmra.mxu0 %v900
        %v1016 = vpop.f32.mrf.mxu0
        %v1017 = vadd.f32 %v988, %v1016
        %1018 = vmatmul.f32.gmra.mxu0 %v907
        %v1019 = vpop.f32.mrf.mxu0
        %v1020 = vadd.f32 %v991, %v1019
        %1021 = vdwg.mxu0
        %1022 = vmatpush.msra.mxu0 %v744
        %1023 = vmatpush.msra.mxu0 %v740
        %1024 = vmatpush.msra.mxu0 %v736
        %1025 = vmatpush.msra.mxu0 %v732
        %1026 = vmatpush.msra.mxu0 %v728
        %1027 = vmatpush.msra.mxu0 %v724
        %1028 = vmatpush.msra.mxu0 %v720
        %1029 = vmatpush.msra.mxu0 %v716
        %1030 = vmatpush.msra.mxu0 %v712
        %1031 = vmatpush.msra.mxu0 %v708
        %1032 = vmatpush.msra.mxu0 %v704
        %1033 = vmatpush.msra.mxu0 %v700
        %1034 = vmatpush.msra.mxu0 %v696
        %1035 = vmatpush.msra.mxu0 %v692
        %1036 = vmatpush.msra.mxu0 %v688
        %1037 = vmatpush.msra.mxu0 %v684
        %1038 = vmatmul.f32.gmra.mxu0 %v887
        %v1039 = vpop.f32.mrf.mxu0
        %v1040 = vadd.f32 %v1011, %v1039
        %1041 = vmatmul.f32.gmra.mxu0 %v894
        %v1042 = vpop.f32.mrf.mxu0
        %v1043 = vadd.f32 %v1014, %v1042
        %1044 = vmatmul.f32.gmra.mxu0 %v901
        %v1045 = vpop.f32.mrf.mxu0
        %v1046 = vadd.f32 %v1017, %v1045
        %1047 = vmatmul.f32.gmra.mxu0 %v908
        %v1048 = vpop.f32.mrf.mxu0
        %v1049 = vadd.f32 %v1020, %v1048
        %1050 = vdwg.mxu0
        %1051 = vmatpush.msra.mxu0 %v808
        %1052 = vmatpush.msra.mxu0 %v804
        %1053 = vmatpush.msra.mxu0 %v800
        %1054 = vmatpush.msra.mxu0 %v796
        %1055 = vmatpush.msra.mxu0 %v792
        %1056 = vmatpush.msra.mxu0 %v788
        %1057 = vmatpush.msra.mxu0 %v784
        %1058 = vmatpush.msra.mxu0 %v780
        %1059 = vmatpush.msra.mxu0 %v776
        %1060 = vmatpush.msra.mxu0 %v772
        %1061 = vmatpush.msra.mxu0 %v768
        %1062 = vmatpush.msra.mxu0 %v764
        %1063 = vmatpush.msra.mxu0 %v760
        %1064 = vmatpush.msra.mxu0 %v756
        %1065 = vmatpush.msra.mxu0 %v752
        %1066 = vmatpush.msra.mxu0 %v748
        %1067 = vmatmul.f32.gmra.mxu0 %v888
        %v1068 = vpop.f32.mrf.mxu0
        %v1069 = vadd.f32 %v1040, %v1068
        %1070 = vmatmul.f32.gmra.mxu0 %v895
        %v1071 = vpop.f32.mrf.mxu0
        %v1072 = vadd.f32 %v1043, %v1071
        %1073 = vmatmul.f32.gmra.mxu0 %v902
        %v1074 = vpop.f32.mrf.mxu0
        %v1075 = vadd.f32 %v1046, %v1074
        %1076 = vmatmul.f32.gmra.mxu0 %v909
        %v1077 = vpop.f32.mrf.mxu0
        %v1078 = vadd.f32 %v1049, %v1077
        %1079 = vdwg.mxu0
        %1080 = vmatpush.msra.mxu0 %v872
        %1081 = vmatpush.msra.mxu0 %v868
        %1082 = vmatpush.msra.mxu0 %v864
        %1083 = vmatpush.msra.mxu0 %v860
        %1084 = vmatpush.msra.mxu0 %v856
        %1085 = vmatpush.msra.mxu0 %v852
        %1086 = vmatpush.msra.mxu0 %v848
        %1087 = vmatpush.msra.mxu0 %v844
        %1088 = vmatpush.msra.mxu0 %v840
        %1089 = vmatpush.msra.mxu0 %v836
        %1090 = vmatpush.msra.mxu0 %v832
        %1091 = vmatpush.msra.mxu0 %v828
        %1092 = vmatpush.msra.mxu0 %v824
        %1093 = vmatpush.msra.mxu0 %v820
        %1094 = vmatpush.msra.mxu0 %v816
        %1095 = vmatpush.msra.mxu0 %v812
        %1096 = vmatmul.f32.gmra.mxu0 %v889
        %v1097 = vpop.f32.mrf.mxu0
        %v1098 = vadd.f32 %v1069, %v1097
        %1099 = vmatmul.f32.gmra.mxu0 %v896
        %v1100 = vpop.f32.mrf.mxu0
        %v1101 = vadd.f32 %v1072, %v1100
        %1102 = vmatmul.f32.gmra.mxu0 %v903
        %v1103 = vpop.f32.mrf.mxu0
        %v1104 = vadd.f32 %v1075, %v1103
        %1105 = vmatmul.f32.gmra.mxu0 %v910
        %v1106 = vpop.f32.mrf.mxu0
        %v1107 = vadd.f32 %v1078, %v1106
        %1108 = vdwg.mxu0
        %1109 = vmatpush.msra.mxu0 0.0
        %1110 = vmatpush.msra.mxu0 0.0
        %1111 = vmatpush.msra.mxu0 0.0
        %1112 = vmatpush.msra.mxu0 0.0
        %1113 = vmatpush.msra.mxu0 0.0
        %1114 = vmatpush.msra.mxu0 0.0
        %1115 = vmatpush.msra.mxu0 0.0
        %1116 = vmatpush.msra.mxu0 0.0
        %1117 = vmatpush.msra.mxu0 0.0
        %1118 = vmatpush.msra.mxu0 0.0
        %1119 = vmatpush.msra.mxu0 0.0
        %1120 = vmatpush.msra.mxu0 0.0
        %1121 = vmatpush.msra.mxu0 0.0
        %1122 = vmatpush.msra.mxu0 0.0
        %1123 = vmatpush.msra.mxu0 %v880
        %1124 = vmatpush.msra.mxu0 %v876
        %1125 = vmatmul.f32.gmra.mxu0 %v924
        %v1126 = vpop.f32.mrf.mxu0
        %v1127 = vadd.f32 %v1098, %v1126
        %1128 = vmatmul.f32.gmra.mxu0 %v927
        %v1129 = vpop.f32.mrf.mxu0
        %v1130 = vadd.f32 %v1101, %v1129
        %1131 = vmatmul.f32.gmra.mxu0 %v930
        %v1132 = vpop.f32.mrf.mxu0
        %v1133 = vadd.f32 %v1104, %v1132
        %1134 = vmatmul.f32.gmra.mxu0 %v933
        %v1135 = vpop.f32.mrf.mxu0
        %v1136 = vadd.f32 %v1107, %v1135
        %1137 = vdwg.mxu0
        %1138 = vmatpush.msra.mxu0 %v553
        %1139 = vmatpush.msra.mxu0 %v549
        %1140 = vmatpush.msra.mxu0 %v545
        %1141 = vmatpush.msra.mxu0 %v541
        %1142 = vmatpush.msra.mxu0 %v537
        %1143 = vmatpush.msra.mxu0 %v533
        %1144 = vmatpush.msra.mxu0 %v529
        %1145 = vmatpush.msra.mxu0 %v525
        %1146 = vmatpush.msra.mxu0 %v521
        %1147 = vmatpush.msra.mxu0 %v517
        %1148 = vmatpush.msra.mxu0 %v513
        %1149 = vmatpush.msra.mxu0 %v509
        %1150 = vmatpush.msra.mxu0 %v505
        %1151 = vmatpush.msra.mxu0 %v501
        %1152 = vmatpush.msra.mxu0 %v497
        %1153 = vmatpush.msra.mxu0 %v493
        %1154 = vmatmul.f32.gmra.mxu0 %v884
        %v1155 = vpop.f32.mrf.mxu0
        %v1156 = vadd.f32 %v915, %v1155
        %1157 = vmatmul.f32.gmra.mxu0 %v891
        %v1158 = vpop.f32.mrf.mxu0
        %v1159 = vadd.f32 %v915, %v1158
        %1160 = vmatmul.f32.gmra.mxu0 %v898
        %v1161 = vpop.f32.mrf.mxu0
        %v1162 = vadd.f32 %v915, %v1161
        %1163 = vmatmul.f32.gmra.mxu0 %v905
        %v1164 = vpop.f32.mrf.mxu0
        %v1165 = vadd.f32 %v915, %v1164
        %1166 = vdwg.mxu0
        %1167 = vmatpush.msra.mxu0 %v617
        %1168 = vmatpush.msra.mxu0 %v613
        %1169 = vmatpush.msra.mxu0 %v609
        %1170 = vmatpush.msra.mxu0 %v605
        %1171 = vmatpush.msra.mxu0 %v601
        %1172 = vmatpush.msra.mxu0 %v597
        %1173 = vmatpush.msra.mxu0 %v593
        %1174 = vmatpush.msra.mxu0 %v589
        %1175 = vmatpush.msra.mxu0 %v585
        %1176 = vmatpush.msra.mxu0 %v581
        %1177 = vmatpush.msra.mxu0 %v577
        %1178 = vmatpush.msra.mxu0 %v573
        %1179 = vmatpush.msra.mxu0 %v569
        %1180 = vmatpush.msra.mxu0 %v565
        %1181 = vmatpush.msra.mxu0 %v561
        %1182 = vmatpush.msra.mxu0 %v557
        %1183 = vmatmul.f32.gmra.mxu0 %v885
        %v1184 = vpop.f32.mrf.mxu0
        %v1185 = vadd.f32 %v1156, %v1184
        %1186 = vmatmul.f32.gmra.mxu0 %v892
        %v1187 = vpop.f32.mrf.mxu0
        %v1188 = vadd.f32 %v1159, %v1187
        %1189 = vmatmul.f32.gmra.mxu0 %v899
        %v1190 = vpop.f32.mrf.mxu0
        %v1191 = vadd.f32 %v1162, %v1190
        %1192 = vmatmul.f32.gmra.mxu0 %v906
        %v1193 = vpop.f32.mrf.mxu0
        %v1194 = vadd.f32 %v1165, %v1193
        %1195 = vdwg.mxu0
        %1196 = vmatpush.msra.mxu0 %v681
        %1197 = vmatpush.msra.mxu0 %v677
        %1198 = vmatpush.msra.mxu0 %v673
        %1199 = vmatpush.msra.mxu0 %v669
        %1200 = vmatpush.msra.mxu0 %v665
        %1201 = vmatpush.msra.mxu0 %v661
        %1202 = vmatpush.msra.mxu0 %v657
        %1203 = vmatpush.msra.mxu0 %v653
        %1204 = vmatpush.msra.mxu0 %v649
        %1205 = vmatpush.msra.mxu0 %v645
        %1206 = vmatpush.msra.mxu0 %v641
        %1207 = vmatpush.msra.mxu0 %v637
        %1208 = vmatpush.msra.mxu0 %v633
        %1209 = vmatpush.msra.mxu0 %v629
        %1210 = vmatpush.msra.mxu0 %v625
        %1211 = vmatpush.msra.mxu0 %v621
        %1212 = vmatmul.f32.gmra.mxu0 %v886
        %v1213 = vpop.f32.mrf.mxu0
        %v1214 = vadd.f32 %v1185, %v1213
        %1215 = vmatmul.f32.gmra.mxu0 %v893
        %v1216 = vpop.f32.mrf.mxu0
        %v1217 = vadd.f32 %v1188, %v1216
        %1218 = vmatmul.f32.gmra.mxu0 %v900
        %v1219 = vpop.f32.mrf.mxu0
        %v1220 = vadd.f32 %v1191, %v1219
        %1221 = vmatmul.f32.gmra.mxu0 %v907
        %v1222 = vpop.f32.mrf.mxu0
        %v1223 = vadd.f32 %v1194, %v1222
        %1224 = vdwg.mxu0
        %1225 = vmatpush.msra.mxu0 %v745
        %1226 = vmatpush.msra.mxu0 %v741
        %1227 = vmatpush.msra.mxu0 %v737
        %1228 = vmatpush.msra.mxu0 %v733
        %1229 = vmatpush.msra.mxu0 %v729
        %1230 = vmatpush.msra.mxu0 %v725
        %1231 = vmatpush.msra.mxu0 %v721
        %1232 = vmatpush.msra.mxu0 %v717
        %1233 = vmatpush.msra.mxu0 %v713
        %1234 = vmatpush.msra.mxu0 %v709
        %1235 = vmatpush.msra.mxu0 %v705
        %1236 = vmatpush.msra.mxu0 %v701
        %1237 = vmatpush.msra.mxu0 %v697
        %1238 = vmatpush.msra.mxu0 %v693
        %1239 = vmatpush.msra.mxu0 %v689
        %1240 = vmatpush.msra.mxu0 %v685
        %1241 = vmatmul.f32.gmra.mxu0 %v887
        %v1242 = vpop.f32.mrf.mxu0
        %v1243 = vadd.f32 %v1214, %v1242
        %1244 = vmatmul.f32.gmra.mxu0 %v894
        %v1245 = vpop.f32.mrf.mxu0
        %v1246 = vadd.f32 %v1217, %v1245
        %1247 = vmatmul.f32.gmra.mxu0 %v901
        %v1248 = vpop.f32.mrf.mxu0
        %v1249 = vadd.f32 %v1220, %v1248
        %1250 = vmatmul.f32.gmra.mxu0 %v908
        %v1251 = vpop.f32.mrf.mxu0
        %v1252 = vadd.f32 %v1223, %v1251
        %1253 = vdwg.mxu0
        %1254 = vmatpush.msra.mxu0 %v809
        %1255 = vmatpush.msra.mxu0 %v805
        %1256 = vmatpush.msra.mxu0 %v801
        %1257 = vmatpush.msra.mxu0 %v797
        %1258 = vmatpush.msra.mxu0 %v793
        %1259 = vmatpush.msra.mxu0 %v789
        %1260 = vmatpush.msra.mxu0 %v785
        %1261 = vmatpush.msra.mxu0 %v781
        %1262 = vmatpush.msra.mxu0 %v777
        %1263 = vmatpush.msra.mxu0 %v773
        %1264 = vmatpush.msra.mxu0 %v769
        %1265 = vmatpush.msra.mxu0 %v765
        %1266 = vmatpush.msra.mxu0 %v761
        %1267 = vmatpush.msra.mxu0 %v757
        %1268 = vmatpush.msra.mxu0 %v753
        %1269 = vmatpush.msra.mxu0 %v749
        %1270 = vmatmul.f32.gmra.mxu0 %v888
        %v1271 = vpop.f32.mrf.mxu0
        %v1272 = vadd.f32 %v1243, %v1271
        %1273 = vmatmul.f32.gmra.mxu0 %v895
        %v1274 = vpop.f32.mrf.mxu0
        %v1275 = vadd.f32 %v1246, %v1274
        %1276 = vmatmul.f32.gmra.mxu0 %v902
        %v1277 = vpop.f32.mrf.mxu0
        %v1278 = vadd.f32 %v1249, %v1277
        %1279 = vmatmul.f32.gmra.mxu0 %v909
        %v1280 = vpop.f32.mrf.mxu0
        %v1281 = vadd.f32 %v1252, %v1280
        %1282 = vdwg.mxu0
        %1283 = vmatpush.msra.mxu0 %v873
        %1284 = vmatpush.msra.mxu0 %v869
        %1285 = vmatpush.msra.mxu0 %v865
        %1286 = vmatpush.msra.mxu0 %v861
        %1287 = vmatpush.msra.mxu0 %v857
        %1288 = vmatpush.msra.mxu0 %v853
        %1289 = vmatpush.msra.mxu0 %v849
        %1290 = vmatpush.msra.mxu0 %v845
        %1291 = vmatpush.msra.mxu0 %v841
        %1292 = vmatpush.msra.mxu0 %v837
        %1293 = vmatpush.msra.mxu0 %v833
        %1294 = vmatpush.msra.mxu0 %v829
        %1295 = vmatpush.msra.mxu0 %v825
        %1296 = vmatpush.msra.mxu0 %v821
        %1297 = vmatpush.msra.mxu0 %v817
        %1298 = vmatpush.msra.mxu0 %v813
        %1299 = vmatmul.f32.gmra.mxu0 %v889
        %v1300 = vpop.f32.mrf.mxu0
        %v1301 = vadd.f32 %v1272, %v1300
        %1302 = vmatmul.f32.gmra.mxu0 %v896
        %v1303 = vpop.f32.mrf.mxu0
        %v1304 = vadd.f32 %v1275, %v1303
        %1305 = vmatmul.f32.gmra.mxu0 %v903
        %v1306 = vpop.f32.mrf.mxu0
        %v1307 = vadd.f32 %v1278, %v1306
        %1308 = vmatmul.f32.gmra.mxu0 %v910
        %v1309 = vpop.f32.mrf.mxu0
        %v1310 = vadd.f32 %v1281, %v1309
        %1311 = vdwg.mxu0
        %1312 = vmatpush.msra.mxu0 0.0
        %1313 = vmatpush.msra.mxu0 0.0
        %1314 = vmatpush.msra.mxu0 0.0
        %1315 = vmatpush.msra.mxu0 0.0
        %1316 = vmatpush.msra.mxu0 0.0
        %1317 = vmatpush.msra.mxu0 0.0
        %1318 = vmatpush.msra.mxu0 0.0
        %1319 = vmatpush.msra.mxu0 0.0
        %1320 = vmatpush.msra.mxu0 0.0
        %1321 = vmatpush.msra.mxu0 0.0
        %1322 = vmatpush.msra.mxu0 0.0
        %1323 = vmatpush.msra.mxu0 0.0
        %1324 = vmatpush.msra.mxu0 0.0
        %1325 = vmatpush.msra.mxu0 0.0
        %1326 = vmatpush.msra.mxu0 %v881
        %1327 = vmatpush.msra.mxu0 %v877
        %1328 = vmatmul.f32.gmra.mxu0 %v924
        %v1329 = vpop.f32.mrf.mxu0
        %v1330 = vadd.f32 %v1301, %v1329
        %1331 = vmatmul.f32.gmra.mxu0 %v927
        %v1332 = vpop.f32.mrf.mxu0
        %v1333 = vadd.f32 %v1304, %v1332
        %1334 = vmatmul.f32.gmra.mxu0 %v930
        %v1335 = vpop.f32.mrf.mxu0
        %v1336 = vadd.f32 %v1307, %v1335
        %1337 = vmatmul.f32.gmra.mxu0 %v933
        %v1338 = vpop.f32.mrf.mxu0
        %v1339 = vadd.f32 %v1310, %v1338
        %1340 = vdwg.mxu0
        %1341 = vmatpush.msra.mxu0 %v554
        %1342 = vmatpush.msra.mxu0 %v550
        %1343 = vmatpush.msra.mxu0 %v546
        %1344 = vmatpush.msra.mxu0 %v542
        %1345 = vmatpush.msra.mxu0 %v538
        %1346 = vmatpush.msra.mxu0 %v534
        %1347 = vmatpush.msra.mxu0 %v530
        %1348 = vmatpush.msra.mxu0 %v526
        %1349 = vmatpush.msra.mxu0 %v522
        %1350 = vmatpush.msra.mxu0 %v518
        %1351 = vmatpush.msra.mxu0 %v514
        %1352 = vmatpush.msra.mxu0 %v510
        %1353 = vmatpush.msra.mxu0 %v506
        %1354 = vmatpush.msra.mxu0 %v502
        %1355 = vmatpush.msra.mxu0 %v498
        %1356 = vmatpush.msra.mxu0 %v494
        %1357 = vmatmul.f32.gmra.mxu0 %v884
        %v1358 = vpop.f32.mrf.mxu0
        %v1359 = vadd.f32 %v916, %v1358
        %1360 = vmatmul.f32.gmra.mxu0 %v891
        %v1361 = vpop.f32.mrf.mxu0
        %v1362 = vadd.f32 %v916, %v1361
        %1363 = vmatmul.f32.gmra.mxu0 %v898
        %v1364 = vpop.f32.mrf.mxu0
        %v1365 = vadd.f32 %v916, %v1364
        %1366 = vmatmul.f32.gmra.mxu0 %v905
        %v1367 = vpop.f32.mrf.mxu0
        %v1368 = vadd.f32 %v916, %v1367
        %1369 = vdwg.mxu0
        %1370 = vmatpush.msra.mxu0 %v618
        %1371 = vmatpush.msra.mxu0 %v614
        %1372 = vmatpush.msra.mxu0 %v610
        %1373 = vmatpush.msra.mxu0 %v606
        %1374 = vmatpush.msra.mxu0 %v602
        %1375 = vmatpush.msra.mxu0 %v598
        %1376 = vmatpush.msra.mxu0 %v594
        %1377 = vmatpush.msra.mxu0 %v590
        %1378 = vmatpush.msra.mxu0 %v586
        %1379 = vmatpush.msra.mxu0 %v582
        %1380 = vmatpush.msra.mxu0 %v578
        %1381 = vmatpush.msra.mxu0 %v574
        %1382 = vmatpush.msra.mxu0 %v570
        %1383 = vmatpush.msra.mxu0 %v566
        %1384 = vmatpush.msra.mxu0 %v562
        %1385 = vmatpush.msra.mxu0 %v558
        %1386 = vmatmul.f32.gmra.mxu0 %v885
        %v1387 = vpop.f32.mrf.mxu0
        %v1388 = vadd.f32 %v1359, %v1387
        %1389 = vmatmul.f32.gmra.mxu0 %v892
        %v1390 = vpop.f32.mrf.mxu0
        %v1391 = vadd.f32 %v1362, %v1390
        %1392 = vmatmul.f32.gmra.mxu0 %v899
        %v1393 = vpop.f32.mrf.mxu0
        %v1394 = vadd.f32 %v1365, %v1393
        %1395 = vmatmul.f32.gmra.mxu0 %v906
        %v1396 = vpop.f32.mrf.mxu0
        %v1397 = vadd.f32 %v1368, %v1396
        %1398 = vdwg.mxu0
        %1399 = vmatpush.msra.mxu0 %v682
        %1400 = vmatpush.msra.mxu0 %v678
        %1401 = vmatpush.msra.mxu0 %v674
        %1402 = vmatpush.msra.mxu0 %v670
        %1403 = vmatpush.msra.mxu0 %v666
        %1404 = vmatpush.msra.mxu0 %v662
        %1405 = vmatpush.msra.mxu0 %v658
        %1406 = vmatpush.msra.mxu0 %v654
        %1407 = vmatpush.msra.mxu0 %v650
        %1408 = vmatpush.msra.mxu0 %v646
        %1409 = vmatpush.msra.mxu0 %v642
        %1410 = vmatpush.msra.mxu0 %v638
        %1411 = vmatpush.msra.mxu0 %v634
        %1412 = vmatpush.msra.mxu0 %v630
        %1413 = vmatpush.msra.mxu0 %v626
        %1414 = vmatpush.msra.mxu0 %v622
        %1415 = vmatmul.f32.gmra.mxu0 %v886
        %v1416 = vpop.f32.mrf.mxu0
        %v1417 = vadd.f32 %v1388, %v1416
        %1418 = vmatmul.f32.gmra.mxu0 %v893
        %v1419 = vpop.f32.mrf.mxu0
        %v1420 = vadd.f32 %v1391, %v1419
        %1421 = vmatmul.f32.gmra.mxu0 %v900
        %v1422 = vpop.f32.mrf.mxu0
        %v1423 = vadd.f32 %v1394, %v1422
        %1424 = vmatmul.f32.gmra.mxu0 %v907
        %v1425 = vpop.f32.mrf.mxu0
        %v1426 = vadd.f32 %v1397, %v1425
        %1427 = vdwg.mxu0
        %1428 = vmatpush.msra.mxu0 %v746
        %1429 = vmatpush.msra.mxu0 %v742
        %1430 = vmatpush.msra.mxu0 %v738
        %1431 = vmatpush.msra.mxu0 %v734
        %1432 = vmatpush.msra.mxu0 %v730
        %1433 = vmatpush.msra.mxu0 %v726
        %1434 = vmatpush.msra.mxu0 %v722
        %1435 = vmatpush.msra.mxu0 %v718
        %1436 = vmatpush.msra.mxu0 %v714
        %1437 = vmatpush.msra.mxu0 %v710
        %1438 = vmatpush.msra.mxu0 %v706
        %1439 = vmatpush.msra.mxu0 %v702
        %1440 = vmatpush.msra.mxu0 %v698
        %1441 = vmatpush.msra.mxu0 %v694
        %1442 = vmatpush.msra.mxu0 %v690
        %1443 = vmatpush.msra.mxu0 %v686
        %1444 = vmatmul.f32.gmra.mxu0 %v887
        %v1445 = vpop.f32.mrf.mxu0
        %v1446 = vadd.f32 %v1417, %v1445
        %1447 = vmatmul.f32.gmra.mxu0 %v894
        %v1448 = vpop.f32.mrf.mxu0
        %v1449 = vadd.f32 %v1420, %v1448
        %1450 = vmatmul.f32.gmra.mxu0 %v901
        %v1451 = vpop.f32.mrf.mxu0
        %v1452 = vadd.f32 %v1423, %v1451
        %1453 = vmatmul.f32.gmra.mxu0 %v908
        %v1454 = vpop.f32.mrf.mxu0
        %v1455 = vadd.f32 %v1426, %v1454
        %1456 = vdwg.mxu0
        %1457 = vmatpush.msra.mxu0 %v810
        %1458 = vmatpush.msra.mxu0 %v806
        %1459 = vmatpush.msra.mxu0 %v802
        %1460 = vmatpush.msra.mxu0 %v798
        %1461 = vmatpush.msra.mxu0 %v794
        %1462 = vmatpush.msra.mxu0 %v790
        %1463 = vmatpush.msra.mxu0 %v786
        %1464 = vmatpush.msra.mxu0 %v782
        %1465 = vmatpush.msra.mxu0 %v778
        %1466 = vmatpush.msra.mxu0 %v774
        %1467 = vmatpush.msra.mxu0 %v770
        %1468 = vmatpush.msra.mxu0 %v766
        %1469 = vmatpush.msra.mxu0 %v762
        %1470 = vmatpush.msra.mxu0 %v758
        %1471 = vmatpush.msra.mxu0 %v754
        %1472 = vmatpush.msra.mxu0 %v750
        %1473 = vmatmul.f32.gmra.mxu0 %v888
        %v1474 = vpop.f32.mrf.mxu0
        %v1475 = vadd.f32 %v1446, %v1474
        %1476 = vmatmul.f32.gmra.mxu0 %v895
        %v1477 = vpop.f32.mrf.mxu0
        %v1478 = vadd.f32 %v1449, %v1477
        %1479 = vmatmul.f32.gmra.mxu0 %v902
        %v1480 = vpop.f32.mrf.mxu0
        %v1481 = vadd.f32 %v1452, %v1480
        %1482 = vmatmul.f32.gmra.mxu0 %v909
        %v1483 = vpop.f32.mrf.mxu0
        %v1484 = vadd.f32 %v1455, %v1483
        %1485 = vdwg.mxu0
        %1486 = vmatpush.msra.mxu0 %v874
        %1487 = vmatpush.msra.mxu0 %v870
        %1488 = vmatpush.msra.mxu0 %v866
        %1489 = vmatpush.msra.mxu0 %v862
        %1490 = vmatpush.msra.mxu0 %v858
        %1491 = vmatpush.msra.mxu0 %v854
        %1492 = vmatpush.msra.mxu0 %v850
        %1493 = vmatpush.msra.mxu0 %v846
        %1494 = vmatpush.msra.mxu0 %v842
        %1495 = vmatpush.msra.mxu0 %v838
        %1496 = vmatpush.msra.mxu0 %v834
        %1497 = vmatpush.msra.mxu0 %v830
        %1498 = vmatpush.msra.mxu0 %v826
        %1499 = vmatpush.msra.mxu0 %v822
        %1500 = vmatpush.msra.mxu0 %v818
        %1501 = vmatpush.msra.mxu0 %v814
        %1502 = vmatmul.f32.gmra.mxu0 %v889
        %v1503 = vpop.f32.mrf.mxu0
        %v1504 = vadd.f32 %v1475, %v1503
        %1505 = vmatmul.f32.gmra.mxu0 %v896
        %v1506 = vpop.f32.mrf.mxu0
        %v1507 = vadd.f32 %v1478, %v1506
        %1508 = vmatmul.f32.gmra.mxu0 %v903
        %v1509 = vpop.f32.mrf.mxu0
        %v1510 = vadd.f32 %v1481, %v1509
        %1511 = vmatmul.f32.gmra.mxu0 %v910
        %v1512 = vpop.f32.mrf.mxu0
        %v1513 = vadd.f32 %v1484, %v1512
        %1514 = vdwg.mxu0
        %1515 = vmatpush.msra.mxu0 0.0
        %1516 = vmatpush.msra.mxu0 0.0
        %1517 = vmatpush.msra.mxu0 0.0
        %1518 = vmatpush.msra.mxu0 0.0
        %1519 = vmatpush.msra.mxu0 0.0
        %1520 = vmatpush.msra.mxu0 0.0
        %1521 = vmatpush.msra.mxu0 0.0
        %1522 = vmatpush.msra.mxu0 0.0
        %1523 = vmatpush.msra.mxu0 0.0
        %1524 = vmatpush.msra.mxu0 0.0
        %1525 = vmatpush.msra.mxu0 0.0
        %1526 = vmatpush.msra.mxu0 0.0
        %1527 = vmatpush.msra.mxu0 0.0
        %1528 = vmatpush.msra.mxu0 0.0
        %1529 = vmatpush.msra.mxu0 %v882
        %1530 = vmatpush.msra.mxu0 %v878
        %1531 = vmatmul.f32.gmra.mxu0 %v924
        %v1532 = vpop.f32.mrf.mxu0
        %v1533 = vadd.f32 %v1504, %v1532
        %1534 = vmatmul.f32.gmra.mxu0 %v927
        %v1535 = vpop.f32.mrf.mxu0
        %v1536 = vadd.f32 %v1507, %v1535
        %1537 = vmatmul.f32.gmra.mxu0 %v930
        %v1538 = vpop.f32.mrf.mxu0
        %v1539 = vadd.f32 %v1510, %v1538
        %1540 = vmatmul.f32.gmra.mxu0 %v933
        %v1541 = vpop.f32.mrf.mxu0
        %v1542 = vadd.f32 %v1513, %v1541
        %1543 = vdwg.mxu0
        %1544 = vmatpush.msra.mxu0 %v555
        %1545 = vmatpush.msra.mxu0 %v551
        %1546 = vmatpush.msra.mxu0 %v547
        %1547 = vmatpush.msra.mxu0 %v543
        %1548 = vmatpush.msra.mxu0 %v539
        %1549 = vmatpush.msra.mxu0 %v535
        %1550 = vmatpush.msra.mxu0 %v531
        %1551 = vmatpush.msra.mxu0 %v527
        %1552 = vmatpush.msra.mxu0 %v523
        %1553 = vmatpush.msra.mxu0 %v519
        %1554 = vmatpush.msra.mxu0 %v515
        %1555 = vmatpush.msra.mxu0 %v511
        %1556 = vmatpush.msra.mxu0 %v507
        %1557 = vmatpush.msra.mxu0 %v503
        %1558 = vmatpush.msra.mxu0 %v499
        %1559 = vmatpush.msra.mxu0 %v495
        %1560 = vmatmul.f32.gmra.mxu0 %v884
        %v1561 = vpop.f32.mrf.mxu0
        %v1562 = vadd.f32 %v917, %v1561
        %1563 = vmatmul.f32.gmra.mxu0 %v891
        %v1564 = vpop.f32.mrf.mxu0
        %v1565 = vadd.f32 %v917, %v1564
        %1566 = vmatmul.f32.gmra.mxu0 %v898
        %v1567 = vpop.f32.mrf.mxu0
        %v1568 = vadd.f32 %v917, %v1567
        %1569 = vmatmul.f32.gmra.mxu0 %v905
        %v1570 = vpop.f32.mrf.mxu0
        %v1571 = vadd.f32 %v917, %v1570
        %1572 = vdwg.mxu0
        %1573 = vmatpush.msra.mxu0 %v619
        %1574 = vmatpush.msra.mxu0 %v615
        %1575 = vmatpush.msra.mxu0 %v611
        %1576 = vmatpush.msra.mxu0 %v607
        %1577 = vmatpush.msra.mxu0 %v603
        %1578 = vmatpush.msra.mxu0 %v599
        %1579 = vmatpush.msra.mxu0 %v595
        %1580 = vmatpush.msra.mxu0 %v591
        %1581 = vmatpush.msra.mxu0 %v587
        %1582 = vmatpush.msra.mxu0 %v583
        %1583 = vmatpush.msra.mxu0 %v579
        %1584 = vmatpush.msra.mxu0 %v575
        %1585 = vmatpush.msra.mxu0 %v571
        %1586 = vmatpush.msra.mxu0 %v567
        %1587 = vmatpush.msra.mxu0 %v563
        %1588 = vmatpush.msra.mxu0 %v559
        %1589 = vmatmul.f32.gmra.mxu0 %v885
        %v1590 = vpop.f32.mrf.mxu0
        %v1591 = vadd.f32 %v1562, %v1590
        %1592 = vmatmul.f32.gmra.mxu0 %v892
        %v1593 = vpop.f32.mrf.mxu0
        %v1594 = vadd.f32 %v1565, %v1593
        %1595 = vmatmul.f32.gmra.mxu0 %v899
        %v1596 = vpop.f32.mrf.mxu0
        %v1597 = vadd.f32 %v1568, %v1596
        %1598 = vmatmul.f32.gmra.mxu0 %v906
        %v1599 = vpop.f32.mrf.mxu0
        %v1600 = vadd.f32 %v1571, %v1599
        %1601 = vdwg.mxu0
        %1602 = vmatpush.msra.mxu0 %v683
        %1603 = vmatpush.msra.mxu0 %v679
        %1604 = vmatpush.msra.mxu0 %v675
        %1605 = vmatpush.msra.mxu0 %v671
        %1606 = vmatpush.msra.mxu0 %v667
        %1607 = vmatpush.msra.mxu0 %v663
        %1608 = vmatpush.msra.mxu0 %v659
        %1609 = vmatpush.msra.mxu0 %v655
        %1610 = vmatpush.msra.mxu0 %v651
        %1611 = vmatpush.msra.mxu0 %v647
        %1612 = vmatpush.msra.mxu0 %v643
        %1613 = vmatpush.msra.mxu0 %v639
        %1614 = vmatpush.msra.mxu0 %v635
        %1615 = vmatpush.msra.mxu0 %v631
        %1616 = vmatpush.msra.mxu0 %v627
        %1617 = vmatpush.msra.mxu0 %v623
        %1618 = vmatmul.f32.gmra.mxu0 %v886
        %v1619 = vpop.f32.mrf.mxu0
        %v1620 = vadd.f32 %v1591, %v1619
        %1621 = vmatmul.f32.gmra.mxu0 %v893
        %v1622 = vpop.f32.mrf.mxu0
        %v1623 = vadd.f32 %v1594, %v1622
        %1624 = vmatmul.f32.gmra.mxu0 %v900
        %v1625 = vpop.f32.mrf.mxu0
        %v1626 = vadd.f32 %v1597, %v1625
        %1627 = vmatmul.f32.gmra.mxu0 %v907
        %v1628 = vpop.f32.mrf.mxu0
        %v1629 = vadd.f32 %v1600, %v1628
        %1630 = vdwg.mxu0
        %1631 = vmatpush.msra.mxu0 %v747
        %1632 = vmatpush.msra.mxu0 %v743
        %1633 = vmatpush.msra.mxu0 %v739
        %1634 = vmatpush.msra.mxu0 %v735
        %1635 = vmatpush.msra.mxu0 %v731
        %1636 = vmatpush.msra.mxu0 %v727
        %1637 = vmatpush.msra.mxu0 %v723
        %1638 = vmatpush.msra.mxu0 %v719
        %1639 = vmatpush.msra.mxu0 %v715
        %1640 = vmatpush.msra.mxu0 %v711
        %1641 = vmatpush.msra.mxu0 %v707
        %1642 = vmatpush.msra.mxu0 %v703
        %1643 = vmatpush.msra.mxu0 %v699
        %1644 = vmatpush.msra.mxu0 %v695
        %1645 = vmatpush.msra.mxu0 %v691
        %1646 = vmatpush.msra.mxu0 %v687
        %1647 = vmatmul.f32.gmra.mxu0 %v887
        %v1648 = vpop.f32.mrf.mxu0
        %v1649 = vadd.f32 %v1620, %v1648
        %1650 = vmatmul.f32.gmra.mxu0 %v894
        %v1651 = vpop.f32.mrf.mxu0
        %v1652 = vadd.f32 %v1623, %v1651
        %1653 = vmatmul.f32.gmra.mxu0 %v901
        %v1654 = vpop.f32.mrf.mxu0
        %v1655 = vadd.f32 %v1626, %v1654
        %1656 = vmatmul.f32.gmra.mxu0 %v908
        %v1657 = vpop.f32.mrf.mxu0
        %v1658 = vadd.f32 %v1629, %v1657
        %1659 = vdwg.mxu0
        %1660 = vmatpush.msra.mxu0 %v811
        %1661 = vmatpush.msra.mxu0 %v807
        %1662 = vmatpush.msra.mxu0 %v803
        %1663 = vmatpush.msra.mxu0 %v799
        %1664 = vmatpush.msra.mxu0 %v795
        %1665 = vmatpush.msra.mxu0 %v791
        %1666 = vmatpush.msra.mxu0 %v787
        %1667 = vmatpush.msra.mxu0 %v783
        %1668 = vmatpush.msra.mxu0 %v779
        %1669 = vmatpush.msra.mxu0 %v775
        %1670 = vmatpush.msra.mxu0 %v771
        %1671 = vmatpush.msra.mxu0 %v767
        %1672 = vmatpush.msra.mxu0 %v763
        %1673 = vmatpush.msra.mxu0 %v759
        %1674 = vmatpush.msra.mxu0 %v755
        %1675 = vmatpush.msra.mxu0 %v751
        %1676 = vmatmul.f32.gmra.mxu0 %v888
        %v1677 = vpop.f32.mrf.mxu0
        %v1678 = vadd.f32 %v1649, %v1677
        %1679 = vmatmul.f32.gmra.mxu0 %v895
        %v1680 = vpop.f32.mrf.mxu0
        %v1681 = vadd.f32 %v1652, %v1680
        %1682 = vmatmul.f32.gmra.mxu0 %v902
        %v1683 = vpop.f32.mrf.mxu0
        %v1684 = vadd.f32 %v1655, %v1683
        %1685 = vmatmul.f32.gmra.mxu0 %v909
        %v1686 = vpop.f32.mrf.mxu0
        %v1687 = vadd.f32 %v1658, %v1686
        %1688 = vdwg.mxu0
        %1689 = vmatpush.msra.mxu0 %v875
        %1690 = vmatpush.msra.mxu0 %v871
        %1691 = vmatpush.msra.mxu0 %v867
        %1692 = vmatpush.msra.mxu0 %v863
        %1693 = vmatpush.msra.mxu0 %v859
        %1694 = vmatpush.msra.mxu0 %v855
        %1695 = vmatpush.msra.mxu0 %v851
        %1696 = vmatpush.msra.mxu0 %v847
        %1697 = vmatpush.msra.mxu0 %v843
        %1698 = vmatpush.msra.mxu0 %v839
        %1699 = vmatpush.msra.mxu0 %v835
        %1700 = vmatpush.msra.mxu0 %v831
        %1701 = vmatpush.msra.mxu0 %v827
        %1702 = vmatpush.msra.mxu0 %v823
        %1703 = vmatpush.msra.mxu0 %v819
        %1704 = vmatpush.msra.mxu0 %v815
        %1705 = vmatmul.f32.gmra.mxu0 %v889
        %v1706 = vpop.f32.mrf.mxu0
        %v1707 = vadd.f32 %v1678, %v1706
        %1708 = vmatmul.f32.gmra.mxu0 %v896
        %v1709 = vpop.f32.mrf.mxu0
        %v1710 = vadd.f32 %v1681, %v1709
        %1711 = vmatmul.f32.gmra.mxu0 %v903
        %v1712 = vpop.f32.mrf.mxu0
        %v1713 = vadd.f32 %v1684, %v1712
        %1714 = vmatmul.f32.gmra.mxu0 %v910
        %v1715 = vpop.f32.mrf.mxu0
        %v1716 = vadd.f32 %v1687, %v1715
        %1717 = vdwg.mxu0
        %1718 = vmatpush.msra.mxu0 0.0
        %1719 = vmatpush.msra.mxu0 0.0
        %1720 = vmatpush.msra.mxu0 0.0
        %1721 = vmatpush.msra.mxu0 0.0
        %1722 = vmatpush.msra.mxu0 0.0
        %1723 = vmatpush.msra.mxu0 0.0
        %1724 = vmatpush.msra.mxu0 0.0
        %1725 = vmatpush.msra.mxu0 0.0
        %1726 = vmatpush.msra.mxu0 0.0
        %1727 = vmatpush.msra.mxu0 0.0
        %1728 = vmatpush.msra.mxu0 0.0
        %1729 = vmatpush.msra.mxu0 0.0
        %1730 = vmatpush.msra.mxu0 0.0
        %1731 = vmatpush.msra.mxu0 0.0
        %1732 = vmatpush.msra.mxu0 %v883
        %1733 = vmatpush.msra.mxu0 %v879
        %1734 = vmatmul.f32.gmra.mxu0 %v924
        %v1735 = vpop.f32.mrf.mxu0
        %v1736 = vadd.f32 %v1707, %v1735
        %1737 = vmatmul.f32.gmra.mxu0 %v927
        %v1738 = vpop.f32.mrf.mxu0
        %v1739 = vadd.f32 %v1710, %v1738
        %1740 = vmatmul.f32.gmra.mxu0 %v930
        %v1741 = vpop.f32.mrf.mxu0
        %v1742 = vadd.f32 %v1713, %v1741
        %1743 = vmatmul.f32.gmra.mxu0 %v933
        %v1744 = vpop.f32.mrf.mxu0
        %v1745 = vadd.f32 %v1716, %v1744
        %1746 = vdwg.mxu0
        %v1747 = vmax.f32 %v1127, 0.0
        %v1748 = vmax.f32 %v1330, 0.0
        %v1749 = vmax.f32 %v1533, 0.0
        %v1750 = vmax.f32 %v1736, 0.0
        %v1751 = vmax.f32 %v1130, 0.0
        %v1752 = vmax.f32 %v1333, 0.0
        %v1753 = vmax.f32 %v1536, 0.0
        %v1754 = vmax.f32 %v1739, 0.0
        %v1755 = vmax.f32 %v1133, 0.0
        %v1756 = vmax.f32 %v1336, 0.0
        %v1757 = vmax.f32 %v1539, 0.0
        %v1758 = vmax.f32 %v1742, 0.0
        %v1759 = vmax.f32 %v1136, 0.0
        %v1760 = vmax.f32 %v1339, 0.0
        %v1761 = vmax.f32 %v1542, 0.0
        %v1762 = vmax.f32 %v1745, 0.0
        %v1763 = vld [vmem:[#allocation8] sm:$0xf]
        %v1764 = vld [vmem:[#allocation8 + $0x4] sm:$0xf]
        %v1765 = vld [vmem:[#allocation8 + $0x8] sm:$0xf]
        %v1766 = vld [vmem:[#allocation8 + $0xc] sm:$0xf]
        %v1767 = vld [vmem:[#allocation8 + $0x10] sm:$0xf]
        %v1768 = vld [vmem:[#allocation8 + $0x14] sm:$0xf]
        %v1769 = vld [vmem:[#allocation8 + $0x18] sm:$0xf]
        %v1770 = vld [vmem:[#allocation8 + $0x1c] sm:$0xf]
        %v1771 = vld [vmem:[#allocation8 + $0x20] sm:$0xf]
        %v1772 = vld [vmem:[#allocation8 + $0x24] sm:$0xf]
        %v1773 = vld [vmem:[#allocation8 + $0x28] sm:$0xf]
        %v1774 = vld [vmem:[#allocation8 + $0x2c] sm:$0xf]
        %v1775 = vld [vmem:[#allocation8 + $0x30] sm:$0xf]
        %v1776 = vld [vmem:[#allocation8 + $0x34] sm:$0xf]
        %v1777 = vld [vmem:[#allocation8 + $0x38] sm:$0xf]
        %v1778 = vld [vmem:[#allocation8 + $0x3c] sm:$0xf]
        %v1779 = vld [vmem:[#allocation8 + $0x40] sm:$0xf]
        %v1780 = vld [vmem:[#allocation8 + $0x44] sm:$0xf]
        %v1781 = vld [vmem:[#allocation8 + $0x48] sm:$0xf]
        %v1782 = vld [vmem:[#allocation8 + $0x4c] sm:$0xf]
        %v1783 = vld [vmem:[#allocation8 + $0x50] sm:$0xf]
        %v1784 = vld [vmem:[#allocation8 + $0x54] sm:$0xf]
        %v1785 = vld [vmem:[#allocation8 + $0x58] sm:$0xf]
        %v1786 = vld [vmem:[#allocation8 + $0x5c] sm:$0xf]
        %v1787 = vld [vmem:[#allocation8 + $0x60] sm:$0xf]
        %v1788 = vld [vmem:[#allocation8 + $0x64] sm:$0xf]
        %v1789 = vld [vmem:[#allocation8 + $0x68] sm:$0xf]
        %v1790 = vld [vmem:[#allocation8 + $0x6c] sm:$0xf]
        %v1791 = vld [vmem:[#allocation8 + $0x70] sm:$0xf]
        %v1792 = vld [vmem:[#allocation8 + $0x74] sm:$0xf]
        %v1793 = vld [vmem:[#allocation8 + $0x78] sm:$0xf]
        %v1794 = vld [vmem:[#allocation8 + $0x7c] sm:$0xf]
        %v1795 = vld [vmem:[#allocation8 + $0x80] sm:$0xf]
        %v1796 = vld [vmem:[#allocation8 + $0x84] sm:$0xf]
        %v1797 = vld [vmem:[#allocation8 + $0x88] sm:$0xf]
        %v1798 = vld [vmem:[#allocation8 + $0x8c] sm:$0xf]
        %v1799 = vld [vmem:[#allocation8 + $0x90] sm:$0xf]
        %v1800 = vld [vmem:[#allocation8 + $0x94] sm:$0xf]
        %v1801 = vld [vmem:[#allocation8 + $0x98] sm:$0xf]
        %v1802 = vld [vmem:[#allocation8 + $0x9c] sm:$0xf]
        %v1803 = vld [vmem:[#allocation8 + $0xa0] sm:$0xf]
        %v1804 = vld [vmem:[#allocation8 + $0xa4] sm:$0xf]
        %v1805 = vld [vmem:[#allocation8 + $0xa8] sm:$0xf]
        %v1806 = vld [vmem:[#allocation8 + $0xac] sm:$0xf]
        %v1807 = vld [vmem:[#allocation8 + $0xb0] sm:$0xf]
        %v1808 = vld [vmem:[#allocation8 + $0xb4] sm:$0xf]
        %v1809 = vld [vmem:[#allocation8 + $0xb8] sm:$0xf]
        %v1810 = vld [vmem:[#allocation8 + $0xbc] sm:$0xf]
        %v1811 = vld [vmem:[#allocation8 + $0xc0] sm:$0xf]
        %v1812 = vld [vmem:[#allocation8 + $0xc4] sm:$0xf]
        %v1813 = vld [vmem:[#allocation8 + $0xc8] sm:$0xf]
        %v1814 = vld [vmem:[#allocation8 + $0xcc] sm:$0xf]
        %v1815 = vld [vmem:[#allocation8 + $0xd0] sm:$0xf]
        %v1816 = vld [vmem:[#allocation8 + $0xd4] sm:$0xf]
        %v1817 = vld [vmem:[#allocation8 + $0xd8] sm:$0xf]
        %v1818 = vld [vmem:[#allocation8 + $0xdc] sm:$0xf]
        %v1819 = vld [vmem:[#allocation8 + $0xe0] sm:$0xf]
        %v1820 = vld [vmem:[#allocation8 + $0xe4] sm:$0xf]
        %v1821 = vld [vmem:[#allocation8 + $0xe8] sm:$0xf]
        %v1822 = vld [vmem:[#allocation8 + $0xec] sm:$0xf]
        %v1823 = vld [vmem:[#allocation8 + $0xf0] sm:$0xf]
        %v1824 = vld [vmem:[#allocation8 + $0xf4] sm:$0xf]
        %v1825 = vld [vmem:[#allocation8 + $0xf8] sm:$0xf]
        %v1826 = vld [vmem:[#allocation8 + $0xfc] sm:$0xf]
        %v1827 = vunpack.c.l.bf16 %v1763
        %v1828 = vunpack.c.l.bf16 %v1764
        %v1829 = vunpack.c.l.bf16 %v1765
        %v1830 = vunpack.c.l.bf16 %v1766
        %v1831 = vunpack.c.l.bf16 %v1767
        %v1832 = vunpack.c.l.bf16 %v1768
        %v1833 = vunpack.c.l.bf16 %v1769
        %v1834 = vunpack.c.l.bf16 %v1770
        %v1835 = vunpack.c.l.bf16 %v1771
        %v1836 = vunpack.c.l.bf16 %v1772
        %v1837 = vunpack.c.l.bf16 %v1773
        %v1838 = vunpack.c.l.bf16 %v1774
        %v1839 = vunpack.c.l.bf16 %v1775
        %v1840 = vunpack.c.l.bf16 %v1776
        %v1841 = vunpack.c.l.bf16 %v1777
        %v1842 = vunpack.c.l.bf16 %v1778
        %v1843 = vunpack.c.l.bf16 %v1779
        %v1844 = vunpack.c.l.bf16 %v1780
        %v1845 = vunpack.c.l.bf16 %v1781
        %v1846 = vunpack.c.l.bf16 %v1782
        %v1847 = vunpack.c.l.bf16 %v1783
        %v1848 = vunpack.c.l.bf16 %v1784
        %v1849 = vunpack.c.l.bf16 %v1785
        %v1850 = vunpack.c.l.bf16 %v1786
        %v1851 = vunpack.c.l.bf16 %v1787
        %v1852 = vunpack.c.l.bf16 %v1788
        %v1853 = vunpack.c.l.bf16 %v1789
        %v1854 = vunpack.c.l.bf16 %v1790
        %v1855 = vunpack.c.l.bf16 %v1791
        %v1856 = vunpack.c.l.bf16 %v1792
        %v1857 = vunpack.c.l.bf16 %v1793
        %v1858 = vunpack.c.l.bf16 %v1794
        %v1859 = vunpack.c.l.bf16 %v1795
        %v1860 = vunpack.c.l.bf16 %v1796
        %v1861 = vunpack.c.l.bf16 %v1797
        %v1862 = vunpack.c.l.bf16 %v1798
        %v1863 = vunpack.c.l.bf16 %v1799
        %v1864 = vunpack.c.l.bf16 %v1800
        %v1865 = vunpack.c.l.bf16 %v1801
        %v1866 = vunpack.c.l.bf16 %v1802
        %v1867 = vunpack.c.l.bf16 %v1803
        %v1868 = vunpack.c.l.bf16 %v1804
        %v1869 = vunpack.c.l.bf16 %v1805
        %v1870 = vunpack.c.l.bf16 %v1806
        %v1871 = vunpack.c.l.bf16 %v1807
        %v1872 = vunpack.c.l.bf16 %v1808
        %v1873 = vunpack.c.l.bf16 %v1809
        %v1874 = vunpack.c.l.bf16 %v1810
        %v1875 = vunpack.c.l.bf16 %v1811
        %v1876 = vunpack.c.l.bf16 %v1812
        %v1877 = vunpack.c.l.bf16 %v1813
        %v1878 = vunpack.c.l.bf16 %v1814
        %v1879 = vunpack.c.l.bf16 %v1815
        %v1880 = vunpack.c.l.bf16 %v1816
        %v1881 = vunpack.c.l.bf16 %v1817
        %v1882 = vunpack.c.l.bf16 %v1818
        %v1883 = vunpack.c.l.bf16 %v1819
        %v1884 = vunpack.c.l.bf16 %v1820
        %v1885 = vunpack.c.l.bf16 %v1821
        %v1886 = vunpack.c.l.bf16 %v1822
        %v1887 = vunpack.c.l.bf16 %v1823
        %v1888 = vunpack.c.l.bf16 %v1824
        %v1889 = vunpack.c.l.bf16 %v1825
        %v1890 = vunpack.c.l.bf16 %v1826
        %v1891 = vld [vmem:[%s4] sm:$0x1]
        %v1893 = vperm.slane %v1891, 0
        %1895 = vmatpush.msra.mxu0 %v1842
        %1896 = vmatpush.msra.mxu0 %v1841
        %1897 = vmatpush.msra.mxu0 %v1840
        %1898 = vmatpush.msra.mxu0 %v1839
        %1899 = vmatpush.msra.mxu0 %v1838
        %1900 = vmatpush.msra.mxu0 %v1837
        %1901 = vmatpush.msra.mxu0 %v1836
        %1902 = vmatpush.msra.mxu0 %v1835
        %1903 = vmatpush.msra.mxu0 %v1834
        %1904 = vmatpush.msra.mxu0 %v1833
        %1905 = vmatpush.msra.mxu0 %v1832
        %1906 = vmatpush.msra.mxu0 %v1831
        %1907 = vmatpush.msra.mxu0 %v1830
        %1908 = vmatpush.msra.mxu0 %v1829
        %1909 = vmatpush.msra.mxu0 %v1828
        %1910 = vmatpush.msra.mxu0 %v1827
        %1911 = vmatmul.f32.gmra.mxu0 %v1747
        %v1912 = vpop.f32.mrf.mxu0
        %v1913 = vadd.f32 %v1893, %v1912
        %1914 = vmatmul.f32.gmra.mxu0 %v1751
        %v1915 = vpop.f32.mrf.mxu0
        %v1916 = vadd.f32 %v1893, %v1915
        %1917 = vmatmul.f32.gmra.mxu0 %v1755
        %v1918 = vpop.f32.mrf.mxu0
        %v1919 = vadd.f32 %v1893, %v1918
        %1920 = vmatmul.f32.gmra.mxu0 %v1759
        %v1921 = vpop.f32.mrf.mxu0
        %v1922 = vadd.f32 %v1893, %v1921
        %1923 = vdwg.mxu0
        %1924 = vmatpush.msra.mxu0 %v1858
        %1925 = vmatpush.msra.mxu0 %v1857
        %1926 = vmatpush.msra.mxu0 %v1856
        %1927 = vmatpush.msra.mxu0 %v1855
        %1928 = vmatpush.msra.mxu0 %v1854
        %1929 = vmatpush.msra.mxu0 %v1853
        %1930 = vmatpush.msra.mxu0 %v1852
        %1931 = vmatpush.msra.mxu0 %v1851
        %1932 = vmatpush.msra.mxu0 %v1850
        %1933 = vmatpush.msra.mxu0 %v1849
        %1934 = vmatpush.msra.mxu0 %v1848
        %1935 = vmatpush.msra.mxu0 %v1847
        %1936 = vmatpush.msra.mxu0 %v1846
        %1937 = vmatpush.msra.mxu0 %v1845
        %1938 = vmatpush.msra.mxu0 %v1844
        %1939 = vmatpush.msra.mxu0 %v1843
        %1940 = vmatmul.f32.gmra.mxu0 %v1748
        %v1941 = vpop.f32.mrf.mxu0
        %v1942 = vadd.f32 %v1913, %v1941
        %1943 = vmatmul.f32.gmra.mxu0 %v1752
        %v1944 = vpop.f32.mrf.mxu0
        %v1945 = vadd.f32 %v1916, %v1944
        %1946 = vmatmul.f32.gmra.mxu0 %v1756
        %v1947 = vpop.f32.mrf.mxu0
        %v1948 = vadd.f32 %v1919, %v1947
        %1949 = vmatmul.f32.gmra.mxu0 %v1760
        %v1950 = vpop.f32.mrf.mxu0
        %v1951 = vadd.f32 %v1922, %v1950
        %1952 = vdwg.mxu0
        %1953 = vmatpush.msra.mxu0 %v1874
        %1954 = vmatpush.msra.mxu0 %v1873
        %1955 = vmatpush.msra.mxu0 %v1872
        %1956 = vmatpush.msra.mxu0 %v1871
        %1957 = vmatpush.msra.mxu0 %v1870
        %1958 = vmatpush.msra.mxu0 %v1869
        %1959 = vmatpush.msra.mxu0 %v1868
        %1960 = vmatpush.msra.mxu0 %v1867
        %1961 = vmatpush.msra.mxu0 %v1866
        %1962 = vmatpush.msra.mxu0 %v1865
        %1963 = vmatpush.msra.mxu0 %v1864
        %1964 = vmatpush.msra.mxu0 %v1863
        %1965 = vmatpush.msra.mxu0 %v1862
        %1966 = vmatpush.msra.mxu0 %v1861
        %1967 = vmatpush.msra.mxu0 %v1860
        %1968 = vmatpush.msra.mxu0 %v1859
        %1969 = vmatmul.f32.gmra.mxu0 %v1749
        %v1970 = vpop.f32.mrf.mxu0
        %v1971 = vadd.f32 %v1942, %v1970
        %1972 = vmatmul.f32.gmra.mxu0 %v1753
        %v1973 = vpop.f32.mrf.mxu0
        %v1974 = vadd.f32 %v1945, %v1973
        %1975 = vmatmul.f32.gmra.mxu0 %v1757
        %v1976 = vpop.f32.mrf.mxu0
        %v1977 = vadd.f32 %v1948, %v1976
        %1978 = vmatmul.f32.gmra.mxu0 %v1761
        %v1979 = vpop.f32.mrf.mxu0
        %v1980 = vadd.f32 %v1951, %v1979
        %1981 = vdwg.mxu0
        %1982 = vmatpush.msra.mxu0 %v1890
        %1983 = vmatpush.msra.mxu0 %v1889
        %1984 = vmatpush.msra.mxu0 %v1888
        %1985 = vmatpush.msra.mxu0 %v1887
        %1986 = vmatpush.msra.mxu0 %v1886
        %1987 = vmatpush.msra.mxu0 %v1885
        %1988 = vmatpush.msra.mxu0 %v1884
        %1989 = vmatpush.msra.mxu0 %v1883
        %1990 = vmatpush.msra.mxu0 %v1882
        %1991 = vmatpush.msra.mxu0 %v1881
        %1992 = vmatpush.msra.mxu0 %v1880
        %1993 = vmatpush.msra.mxu0 %v1879
        %1994 = vmatpush.msra.mxu0 %v1878
        %1995 = vmatpush.msra.mxu0 %v1877
        %1996 = vmatpush.msra.mxu0 %v1876
        %1997 = vmatpush.msra.mxu0 %v1875
        %1998 = vmatmul.f32.gmra.mxu0 %v1750
        %v1999 = vpop.f32.mrf.mxu0
        %v2000 = vadd.f32 %v1971, %v1999
        %2001 = vmatmul.f32.gmra.mxu0 %v1754
        %v2002 = vpop.f32.mrf.mxu0
        %v2003 = vadd.f32 %v1974, %v2002
        %2004 = vmatmul.f32.gmra.mxu0 %v1758
        %v2005 = vpop.f32.mrf.mxu0
        %v2006 = vadd.f32 %v1977, %v2005
        %2007 = vmatmul.f32.gmra.mxu0 %v1762
        %v2008 = vpop.f32.mrf.mxu0
        %v2009 = vadd.f32 %v1980, %v2008
        %2010 = vdwg.mxu0
        %2011 = vst [vmem:[%s293] sm:$0xff] %v2000
        %2012 = vst [vmem:[%s293 + $0x8] sm:$0xff] %v2003
        %2013 = vst [vmem:[%s293 + $0x10] sm:$0xff] %v2006
        %2014 = vst [vmem:[%s293 + $0x18] sm:$0xff] %v2009
        %s2015 = sand.u32 %s142, 1
        %s2016 = scalar_lea.sflag [#allocation4], %s2015
        %s2017 = sand.u32 %s142, 1
        %s2018 = smul.addr %s2017, 32
        %s2019 = scalar_lea.vmem [#allocation10], %s2018
        // Predicated region
        $region57: #{tpu_custom_call.1} parent=39 // pred_check
          %p2020 = pneg %p152
        $region58: #{tpu_custom_call.1} parent=39 // pred_check_branch
          %2022 = sbr.rel (%p2020) target = $region60
        $region59: #{tpu_custom_call.1} parent=39 // pred_region
          %s2023 = smul.u32 4, %s24
          %2025 = vsyncadd %s2016, 0
          %s2026 = smul.addr %s2023, 8
          %s2027 = scalar_lea.hbm %s5, %s2026
          %s2028 = sshll.u32 %s2019, 4
          %s2029 = int_to_ptr.vmem [resolvable:$true] %s2028
          %s2030 = sshll.u32 %s2027, 4
          %s2031 = int_to_ptr.hbm [resolvable:$true] %s2030
          %2036 = dma.vmem_to_hbm [thread:$0]  %s2029, 512, %s2031, %s2016, 128, 128, 8
        $region60: #{tpu_custom_call.1} parent=39 // pred_fallthru
          _
      $region40: #{tpu_custom_call.1} parent=5 // pred_fallthru
        _
      %p2037 = scmp.le.s32.totalorder 2, %s19
      // Predicated region
      $region61: #{tpu_custom_call.1} parent=5 // pred_check
        %p2038 = pneg %p2037
      $region62: #{tpu_custom_call.1} parent=5 // pred_check_branch
        %2040 = sbr.rel (%p2038) target = $region64
      $region63: #{tpu_custom_call.1} parent=5 // pred_region
        %s2041 = ssub.s32 %s19, 2
        // Predicated region
        $region65: #{tpu_custom_call.1} parent=63 // pred_check
          %p2042 = pneg %p158
        $region66: #{tpu_custom_call.1} parent=63 // pred_check_branch
          %2044 = sbr.rel (%p2042) target = $region68
        $region67: #{tpu_custom_call.1} parent=63 // pred_region
          %s2045 = sand.u32 %s143, 1
          %s2046 = scalar_lea.sflag [#allocation4], %s2045
          %s2047 = sand.u32 %s143, 1
          %s2048 = smul.addr %s2047, 32
          %s2049 = scalar_lea.vmem [#allocation10], %s2048
          %2051 = dma.done %s2046, 512
        $region68: #{tpu_custom_call.1} parent=63 // pred_fallthru
          _
      $region64: #{tpu_custom_call.1} parent=5 // pred_fallthru
        _
    $region6: #{tpu_custom_call.1} parent=1 // loop_footer
      %s23 = sadd.s32 1, %s19
    $region7: #{tpu_custom_call.1} parent=1 // loop_footer_branch
      %18 = sbr.rel target = $region3
    $region8: #{tpu_custom_call.1} parent=1 // loop_exit
      _
    %2052 = vsyncpa [#allocation3], 1
    %s2053 = scalar_lea.sflag [#allocation3], 1
    %2054 = vsyncpa %s2053, 1
    %2055 = vsyncpa [#allocation6], 1
    %2056 = vsyncpa [#allocation9], 1
    %2057 = vsyncpa [#allocation4], 1
    %s2058 = scalar_lea.sflag [#allocation4], 1
    %2059 = vsyncpa %s2058, 1

</llo_original>
